<compile_context>
chip_gen: v7x
topology: tpu7x:2x2x1
jax: 0.10.0
libtpu: 0.0.40
codegen_flags: <defaults>
</compile_context>

<pallas_src>
import jax
import jax.numpy as jnp
from jax import lax
from jax.experimental import pallas as pl
from jax.experimental.pallas import tpu as pltpu
import numpy as np

# ---------------- config ----------------
B = 1
SEQ_LEN = 16
ENC_IN = 4                       # channels C
D_MODEL = 128
SEG_LEN = 4
PRED_LEN = 8
SEG_NUM_X = SEQ_LEN // SEG_LEN   # 4
SEG_NUM_Y = PRED_LEN // SEG_LEN  # 2

WEIGHT_DTYPE = jnp.bfloat16      # MXU operand dtype for the big weights

# f32 slab row layout
_GI_ROWS = SEG_NUM_Y * ENC_IN            # 8 rows of precomputed decoder input gates
_ROW_BEMB = _GI_ROWS                     # 8
_ROW_BIH = _GI_ROWS + 1                  # 9
_ROW_BHH = _GI_ROWS + 2                  # 10
_ROW_BPRED = _GI_ROWS + 3                # 11 .. 11+SEG_LEN
_FSLAB_ROWS = 16


# ---------------- shared GRU gating (f32 VPU/EUP math) ----------------
def _gates(gi, gh, h, d):
    """PyTorch GRU cell gating, gate order (r, z, n) along columns."""
    r = jax.nn.sigmoid(gi[:, :d] + gh[:, :d])
    z = jax.nn.sigmoid(gi[:, d:2 * d] + gh[:, d:2 * d])
    n = jnp.tanh(gi[:, 2 * d:] + r * gh[:, 2 * d:])
    return (1.0 - z) * n + z * h


# ---------------- fused kernel ----------------
def segrnn_kernel(x_ref, wslab_ref, smallw_ref, fslab_ref, out_ref):
    f32 = jnp.float32
    bf16 = WEIGHT_DTYPE
    d, c, s = D_MODEL, ENC_IN, SEG_LEN
    nx, ny = SEG_NUM_X, SEG_NUM_Y

    # ---- f32 slab slices: biases + precomputed decoder input gates ----
    gi_dec = fslab_ref[0:_GI_ROWS, :]                     # [M*C, 3D]
    b_emb = fslab_ref[_ROW_BEMB:_ROW_BEMB + 1, 0:d]       # [1, D]
    b_ih = fslab_ref[_ROW_BIH:_ROW_BIH + 1, :]            # [1, 3D]
    b_hh = fslab_ref[_ROW_BHH:_ROW_BHH + 1, :]            # [1, 3D]
    b_pred = fslab_ref[_ROW_BPRED:_ROW_BPRED + s, 0:ny * c]  # [seg_len, M*C]

    # ---- preprocessing: subtract last value, go channel-major ----
    xe = x_ref[0]                                         # [seq_len, C]
    seq_last = xe[SEQ_LEN - 1:SEQ_LEN, :]                 # [1, C]
    xd = xe - seq_last                                    # [seq_len, C]

    # Transpose to [C, seq_len] on the MXU: xt = I_C @ xd.T  (A @ B.T pattern).
    rows = lax.broadcasted_iota(jnp.int32, (c, c), 0)
    cols = lax.broadcasted_iota(jnp.int32, (c, c), 1)
    eye_c = (rows == cols).astype(f32)
    xt = lax.dot_general(eye_c, xd, (((1,), (1,)), ((), ())),
                         preferred_element_type=f32)      # [C, seq_len]

    # Stack segments: row t*C + ch = (channel ch, segment t)
    x_all = jnp.concatenate(
        [xt[:, t * s:(t + 1) * s] for t in range(nx)], axis=0)   # [NX*C, seg_len]

    # ---- hoisted value_embedding + fused input->hidden gates (off the serial path) ----
    w_emb = smallw_ref[0:s, :]                            # bf16 [seg_len, D]
    emb_all = jnp.dot(x_all.astype(bf16), w_emb,
                      preferred_element_type=f32) + b_emb          # [NX*C, D]
    emb_all = jnp.maximum(emb_all, 0.0)                             # ReLU
    gi_all = jnp.dot(emb_all.astype(bf16), wslab_ref[:, 0:3 * d],
                     preferred_element_type=f32) + b_ih             # [NX*C, 3D]

    # ---- GRU recurrence: only h @ W_hh + gating on the serial chain ----
    b_hh_rows = jnp.broadcast_to(b_hh, (c, 3 * d))        # hoisted out of the loop
    h = jnp.zeros((c, d), f32)
    for t in range(nx):
        gh = jnp.dot(h.astype(bf16), wslab_ref[:, 3 * d:6 * d],
                     preferred_element_type=f32) + b_hh_rows        # [C, 3D]
        h = _gates(gi_all[t * c:(t + 1) * c, :], gh, h, d)

    # ---- decoder: ONE stacked GRU step over all (m, c) rows ----
    gh_dec = jnp.dot(h.astype(bf16), wslab_ref[:, 3 * d:6 * d],
                     preferred_element_type=f32) + b_hh_rows        # [C, 3D]
    gh_all = jnp.concatenate([gh_dec] * ny, axis=0)                 # [M*C, 3D]
    h_all = jnp.concatenate([h] * ny, axis=0)                       # [M*C, D]
    hy_all = _gates(gi_dec, gh_all, h_all, d)                       # [M*C, D]

    # ---- predict: y_allT[s, m*C+c] = (hy_all @ W_pred).T  (A @ B.T on MXU) ----
    w_predT = smallw_ref[s:2 * s, :]                                # bf16 [seg_len, D]
    y_allT = lax.dot_general(w_predT, hy_all.astype(bf16),
                             (((1,), (1,)), ((), ())),
                             preferred_element_type=f32) + b_pred   # [seg_len, M*C]

    y = jnp.concatenate(
        [y_allT[:, m * c:(m + 1) * c] for m in range(ny)], axis=0)  # [pred_len, C]
    out_ref[...] = (y + seq_last)[None]                             # [1, pred_len, C]


# ---------------- parameter preparation (done once, outside the forward) ----------------
def prepare_params(p, wdt=WEIGHT_DTYPE):
    d, c, s, m = D_MODEL, ENC_IN, SEG_LEN, SEG_NUM_Y

    # decoder input gates precomputed (B==1, parameter-only); rows ordered (m, c)
    pos = jnp.concatenate(
        [jnp.broadcast_to(p['pos_emb'][None, :, :], (c, m, d // 2)),
         jnp.broadcast_to(p['channel_emb'][:, None, :], (c, m, d // 2))],
        axis=-1)                                                   # [C, M, D]
    pos_mc = pos.transpose(1, 0, 2).reshape(m * c, d)              # row (m, c)
    gi_dec = (jnp.dot(pos_mc.astype(wdt), p['w_ih'].astype(wdt),
                      preferred_element_type=jnp.float32) + p['b_ih'])  # [M*C, 3D]

    # packed bf16 weight slab [D, 6D]: cols 0:3D = W_ih, 3D:6D = W_hh
    wslab = jnp.concatenate([p['w_ih'], p['w_hh']], axis=1).astype(wdt)

    # small bf16 slab [2*seg_len, D]: rows 0:s = W_emb, s:2s = W_pred^T
    smallw = jnp.concatenate([p['w_emb'], p['w_pred'].T], axis=0).astype(wdt)

    # packed f32 slab [16, 3D]
    fslab = jnp.zeros((_FSLAB_ROWS, 3 * d), jnp.float32)
    fslab = fslab.at[0:_GI_ROWS, :].set(gi_dec)
    fslab = fslab.at[_ROW_BEMB, 0:d].set(p['b_emb'][0])
    fslab = fslab.at[_ROW_BIH, :].set(p['b_ih'][0])
    fslab = fslab.at[_ROW_BHH, :].set(p['b_hh'][0])
    fslab = fslab.at[_ROW_BPRED:_ROW_BPRED + s, 0:m * c].set(
        jnp.broadcast_to(p['b_pred'].reshape(s, 1), (s, m * c)))
    return {'wslab': wslab, 'smallw': smallw, 'fslab': fslab}


# ---------------- forward wrapper (single pallas_call, no glue ops) ----------------
@jax.jit
def segrnn_forward(x_enc, pp):
    vmem = pl.BlockSpec(memory_space=pltpu.MemorySpace.VMEM)
    cost = pl.CostEstimate(flops=3_700_000, transcendentals=9_216,
                           bytes_accessed=225_000)
    return pl.pallas_call(
        segrnn_kernel,
        out_shape=jax.ShapeDtypeStruct((B, PRED_LEN, ENC_IN), jnp.float32),
        in_specs=[vmem] * 4,
        out_specs=vmem,
        cost_estimate=cost,
    )(x_enc, pp['wslab'], pp['smallw'], pp['fslab'])


# ---------------- pure-JAX reference (mirrors the kernel's bf16-MXU numerics) ----------------
def ref_forward(x_enc, p, wdt=WEIGHT_DTYPE):
    f32 = jnp.float32
    b, _, c = x_enc.shape
    d = D_MODEL

    def mm(a, w):  # bf16 MXU operands, f32 accumulation — same as the kernel
        return jnp.dot(a.astype(wdt), w.astype(wdt), preferred_element_type=f32)

    seq_last = x_enc[:, -1:, :]
    x = (x_enc - seq_last).transpose(0, 2, 1).reshape(b * c, SEG_NUM_X, SEG_LEN)

    h = jnp.zeros((b * c, d), f32)
    for t in range(SEG_NUM_X):
        emb = jnp.maximum(mm(x[:, t, :], p['w_emb']) + p['b_emb'], 0.0)
        gi = mm(emb, p['w_ih']) + p['b_ih']
        gh = mm(h, p['w_hh']) + p['b_hh']
        h = _gates(gi, gh, h, d)

    pos = jnp.concatenate(
        [jnp.broadcast_to(p['pos_emb'][None, :, :], (c, SEG_NUM_Y, d // 2)),
         jnp.broadcast_to(p['channel_emb'][:, None, :], (c, SEG_NUM_Y, d // 2))],
        axis=-1).reshape(c * SEG_NUM_Y, d)
    h0 = jnp.repeat(h, SEG_NUM_Y, axis=0)
    gi = mm(pos, p['w_ih']) + p['b_ih']
    gh = mm(h0, p['w_hh']) + p['b_hh']
    hy = _gates(gi, gh, h0, d)
    y = mm(hy, p['w_pred']) + p['b_pred']
    y = y.reshape(b, c, PRED_LEN).transpose(0, 2, 1) + seq_last
    return y[:, -PRED_LEN:, :]


# ---------------- parameter init ----------------
def init_params(key):
    d = D_MODEL
    ks = jax.random.split(key, 10)
    u = lambda k, shape, sc: jax.random.uniform(k, shape, jnp.float32, -sc, sc)
    s_emb = 1.0 / np.sqrt(SEG_LEN)
    s_rnn = 1.0 / np.sqrt(d)
    return {
        'w_emb': u(ks[0], (SEG_LEN, d), s_emb),
        'b_emb': u(ks[1], (1, d), s_emb),
        'w_ih': u(ks[2], (d, 3 * d), s_rnn),     # gate order r,z,n along columns
        'b_ih': u(ks[3], (1, 3 * d), s_rnn),
        'w_hh': u(ks[4], (d, 3 * d), s_rnn),
        'b_hh': u(ks[5], (1, 3 * d), s_rnn),
        'pos_emb': jax.random.normal(ks[6], (SEG_NUM_Y, d // 2), jnp.float32),
        'channel_emb': jax.random.normal(ks[7], (ENC_IN, d // 2), jnp.float32),
        'w_pred': u(ks[8], (d, SEG_LEN), s_rnn),
        'b_pred': u(ks[9], (1, SEG_LEN), s_rnn),
    }


if __name__ == "__main__":
    key = jax.random.PRNGKey(0)
    k_x, k_p = jax.random.split(key)
    params = init_params(k_p)
    x_enc = jax.random.normal(k_x, (B, SEQ_LEN, ENC_IN), jnp.float32)

    prepped = prepare_params(params)            # one-time weight prepacking
    out = segrnn_forward(x_enc, prepped)
    out = jax.block_until_ready(out)
    assert out.shape == (B, PRED_LEN, ENC_IN), out.shape

    ref = jax.block_until_ready(ref_forward(x_enc, params))
    np.testing.assert_allclose(np.asarray(out), np.asarray(ref), rtol=1e-3, atol=1e-3)

    print("KERNEL_OK")
</pallas_src>

<mosaic_0001>
module attributes {stable_mosaic.version = 11 : i64} {
  func.func @segrnn_kernel(%arg0: memref<1x16x4xf32, #tpu.memory_space<vmem>>, %arg1: memref<128x768xbf16, #tpu.memory_space<vmem>>, %arg2: memref<8x128xbf16, #tpu.memory_space<vmem>>, %arg3: memref<16x384xf32, #tpu.memory_space<vmem>>, %arg4: memref<1x8x4xf32, #tpu.memory_space<vmem>>) attributes {dimension_semantics = [], scalar_prefetch = 0 : i64, scratch_operands = 0 : i64, tpu.core_type = #tpu.core_type<tc>} {
    %c0 = arith.constant 0 : index
    %c0_0 = arith.constant 0 : index
    %0 = vector.load %arg3[%c0, %c0_0] : memref<16x384xf32, #tpu.memory_space<vmem>>, vector<8x384xf32>
    %c8 = arith.constant 8 : index
    %c0_1 = arith.constant 0 : index
    %1 = vector.load %arg3[%c8, %c0_1] : memref<16x384xf32, #tpu.memory_space<vmem>>, vector<1x128xf32>
    %c9 = arith.constant 9 : index
    %c0_2 = arith.constant 0 : index
    %2 = vector.load %arg3[%c9, %c0_2] : memref<16x384xf32, #tpu.memory_space<vmem>>, vector<1x384xf32>
    %c10 = arith.constant 10 : index
    %c0_3 = arith.constant 0 : index
    %3 = vector.load %arg3[%c10, %c0_3] : memref<16x384xf32, #tpu.memory_space<vmem>>, vector<1x384xf32>
    %c11 = arith.constant 11 : index
    %c0_4 = arith.constant 0 : index
    %4 = vector.load %arg3[%c11, %c0_4] : memref<16x384xf32, #tpu.memory_space<vmem>>, vector<4x8xf32>
    %c0_5 = arith.constant 0 : index
    %c0_6 = arith.constant 0 : index
    %c0_7 = arith.constant 0 : index
    %5 = vector.load %arg0[%c0_5, %c0_6, %c0_7] : memref<1x16x4xf32, #tpu.memory_space<vmem>>, vector<1x16x4xf32>
    %6 = vector.shape_cast %5 : vector<1x16x4xf32> to vector<16x4xf32>
    %7 = vector.extract_strided_slice %6 {offsets = [15, 0], sizes = [1, 4], strides = [1, 1]} : vector<16x4xf32> to vector<1x4xf32>
    %8 = vector.broadcast %7 : vector<1x4xf32> to vector<16x4xf32>
    %9 = arith.subf %6, %8 : vector<16x4xf32>
    %10 = tpu.iota {dimensions = array<i32: 0>} : vector<4x4xi32>
    %11 = tpu.iota {dimensions = array<i32: 1>} : vector<4x4xi32>
    %12 = arith.cmpi eq, %10, %11 : vector<4x4xi32>
    %13 = arith.extui %12 : vector<4x4xi1> to vector<4x4xi32>
    %14 = arith.sitofp %13 : vector<4x4xi32> to vector<4x4xf32>
    %cst = arith.constant dense<0.000000e+00> : vector<4x16xf32>
    %15 = tpu.matmul %14, %9, %cst {dimension_numbers = #tpu.dot_dimension_numbers<[1], [1], [0], [0], [0, 0, 1, 0], [], []>} : vector<4x4xf32>, vector<16x4xf32>, vector<4x16xf32> -> vector<4x16xf32>
    %16 = vector.extract_strided_slice %15 {offsets = [0, 0], sizes = [4, 4], strides = [1, 1]} : vector<4x16xf32> to vector<4x4xf32>
    %17 = vector.extract_strided_slice %15 {offsets = [0, 4], sizes = [4, 4], strides = [1, 1]} : vector<4x16xf32> to vector<4x4xf32>
    %18 = vector.extract_strided_slice %15 {offsets = [0, 8], sizes = [4, 4], strides = [1, 1]} : vector<4x16xf32> to vector<4x4xf32>
    %19 = vector.extract_strided_slice %15 {offsets = [0, 12], sizes = [4, 4], strides = [1, 1]} : vector<4x16xf32> to vector<4x4xf32>
    %20 = tpu.concatenate %16, %17, %18, %19 in 0 : vector<4x4xf32>, vector<4x4xf32>, vector<4x4xf32>, vector<4x4xf32> -> vector<16x4xf32>
    %c0_8 = arith.constant 0 : index
    %c0_9 = arith.constant 0 : index
    %21 = vector.load %arg2[%c0_8, %c0_9] : memref<8x128xbf16, #tpu.memory_space<vmem>>, vector<4x128xbf16>
    %22 = arith.truncf %20 : vector<16x4xf32> to vector<16x4xbf16>
    %cst_10 = arith.constant dense<0.000000e+00> : vector<16x128xf32>
    %23 = tpu.matmul %22, %21, %cst_10 {dimension_numbers = #tpu.dot_dimension_numbers<[1], [0], [0], [1], [0, 0, 1, 1], [], []>} : vector<16x4xbf16>, vector<4x128xbf16>, vector<16x128xf32> -> vector<16x128xf32>
    %24 = vector.broadcast %1 : vector<1x128xf32> to vector<16x128xf32>
    %25 = arith.addf %23, %24 : vector<16x128xf32>
    %cst_11 = arith.constant 0.000000e+00 : f32
    %26 = vector.broadcast %cst_11 : f32 to vector<16x128xf32>
    %27 = arith.maximumf %25, %26 : vector<16x128xf32>
    %28 = arith.truncf %27 : vector<16x128xf32> to vector<16x128xbf16>
    %c0_12 = arith.constant 0 : index
    %c0_13 = arith.constant 0 : index
    %29 = vector.load %arg1[%c0_12, %c0_13] : memref<128x768xbf16, #tpu.memory_space<vmem>>, vector<128x384xbf16>
    %cst_14 = arith.constant dense<0.000000e+00> : vector<16x384xf32>
    %30 = tpu.matmul %28, %29, %cst_14 {dimension_numbers = #tpu.dot_dimension_numbers<[1], [0], [0], [1], [0, 0, 1, 1], [], []>} : vector<16x128xbf16>, vector<128x384xbf16>, vector<16x384xf32> -> vector<16x384xf32>
    %31 = vector.broadcast %2 : vector<1x384xf32> to vector<16x384xf32>
    %32 = arith.addf %30, %31 : vector<16x384xf32>
    %33 = vector.shape_cast %3 : vector<1x384xf32> to vector<1x384xf32>
    %34 = vector.broadcast %33 : vector<1x384xf32> to vector<4x384xf32>
    %cst_15 = arith.constant 0.000000e+00 : f32
    %35 = vector.broadcast %cst_15 : f32 to vector<4x128xf32>
    %36 = arith.truncf %35 : vector<4x128xf32> to vector<4x128xbf16>
    %c0_16 = arith.constant 0 : index
    %c384 = arith.constant 384 : index
    %37 = vector.load %arg1[%c0_16, %c384] : memref<128x768xbf16, #tpu.memory_space<vmem>>, vector<128x384xbf16>
    %cst_17 = arith.constant dense<0.000000e+00> : vector<4x384xf32>
    %38 = tpu.matmul %36, %37, %cst_17 {dimension_numbers = #tpu.dot_dimension_numbers<[1], [0], [0], [1], [0, 0, 1, 1], [], []>} : vector<4x128xbf16>, vector<128x384xbf16>, vector<4x384xf32> -> vector<4x384xf32>
    %39 = arith.addf %38, %34 : vector<4x384xf32>
    %40 = vector.extract_strided_slice %32 {offsets = [0, 0], sizes = [4, 384], strides = [1, 1]} : vector<16x384xf32> to vector<4x384xf32>
    %41 = vector.extract_strided_slice %40 {offsets = [0, 0], sizes = [4, 128], strides = [1, 1]} : vector<4x384xf32> to vector<4x128xf32>
    %42 = vector.extract_strided_slice %39 {offsets = [0, 0], sizes = [4, 128], strides = [1, 1]} : vector<4x384xf32> to vector<4x128xf32>
    %43 = arith.addf %41, %42 : vector<4x128xf32>
    %44 = arith.negf %43 : vector<4x128xf32>
    %45 = math.exp %44 : vector<4x128xf32>
    %cst_18 = arith.constant 1.000000e+00 : f32
    %46 = vector.broadcast %cst_18 : f32 to vector<4x128xf32>
    %47 = arith.addf %46, %45 : vector<4x128xf32>
    %48 = arith.divf %46, %47 : vector<4x128xf32>
    %49 = vector.extract_strided_slice %40 {offsets = [0, 128], sizes = [4, 128], strides = [1, 1]} : vector<4x384xf32> to vector<4x128xf32>
    %50 = vector.extract_strided_slice %39 {offsets = [0, 128], sizes = [4, 128], strides = [1, 1]} : vector<4x384xf32> to vector<4x128xf32>
    %51 = arith.addf %49, %50 : vector<4x128xf32>
    %52 = arith.negf %51 : vector<4x128xf32>
    %53 = math.exp %52 : vector<4x128xf32>
    %cst_19 = arith.constant 1.000000e+00 : f32
    %54 = vector.broadcast %cst_19 : f32 to vector<4x128xf32>
    %55 = arith.addf %54, %53 : vector<4x128xf32>
    %56 = arith.divf %54, %55 : vector<4x128xf32>
    %57 = vector.extract_strided_slice %40 {offsets = [0, 256], sizes = [4, 128], strides = [1, 1]} : vector<4x384xf32> to vector<4x128xf32>
    %58 = vector.extract_strided_slice %39 {offsets = [0, 256], sizes = [4, 128], strides = [1, 1]} : vector<4x384xf32> to vector<4x128xf32>
    %59 = arith.mulf %48, %58 : vector<4x128xf32>
    %60 = arith.addf %57, %59 : vector<4x128xf32>
    %61 = math.tanh %60 : vector<4x128xf32>
    %cst_20 = arith.constant 1.000000e+00 : f32
    %62 = vector.broadcast %cst_20 : f32 to vector<4x128xf32>
    %63 = arith.subf %62, %56 : vector<4x128xf32>
    %64 = arith.mulf %63, %61 : vector<4x128xf32>
    %65 = arith.mulf %56, %35 : vector<4x128xf32>
    %66 = arith.addf %64, %65 : vector<4x128xf32>
    %67 = arith.truncf %66 : vector<4x128xf32> to vector<4x128xbf16>
    %c0_21 = arith.constant 0 : index
    %c384_22 = arith.constant 384 : index
    %68 = vector.load %arg1[%c0_21, %c384_22] : memref<128x768xbf16, #tpu.memory_space<vmem>>, vector<128x384xbf16>
    %cst_23 = arith.constant dense<0.000000e+00> : vector<4x384xf32>
    %69 = tpu.matmul %67, %68, %cst_23 {dimension_numbers = #tpu.dot_dimension_numbers<[1], [0], [0], [1], [0, 0, 1, 1], [], []>} : vector<4x128xbf16>, vector<128x384xbf16>, vector<4x384xf32> -> vector<4x384xf32>
    %70 = arith.addf %69, %34 : vector<4x384xf32>
    %71 = vector.extract_strided_slice %32 {offsets = [4, 0], sizes = [4, 384], strides = [1, 1]} : vector<16x384xf32> to vector<4x384xf32>
    %72 = vector.extract_strided_slice %71 {offsets = [0, 0], sizes = [4, 128], strides = [1, 1]} : vector<4x384xf32> to vector<4x128xf32>
    %73 = vector.extract_strided_slice %70 {offsets = [0, 0], sizes = [4, 128], strides = [1, 1]} : vector<4x384xf32> to vector<4x128xf32>
    %74 = arith.addf %72, %73 : vector<4x128xf32>
    %75 = arith.negf %74 : vector<4x128xf32>
    %76 = math.exp %75 : vector<4x128xf32>
    %cst_24 = arith.constant 1.000000e+00 : f32
    %77 = vector.broadcast %cst_24 : f32 to vector<4x128xf32>
    %78 = arith.addf %77, %76 : vector<4x128xf32>
    %79 = arith.divf %77, %78 : vector<4x128xf32>
    %80 = vector.extract_strided_slice %71 {offsets = [0, 128], sizes = [4, 128], strides = [1, 1]} : vector<4x384xf32> to vector<4x128xf32>
    %81 = vector.extract_strided_slice %70 {offsets = [0, 128], sizes = [4, 128], strides = [1, 1]} : vector<4x384xf32> to vector<4x128xf32>
    %82 = arith.addf %80, %81 : vector<4x128xf32>
    %83 = arith.negf %82 : vector<4x128xf32>
    %84 = math.exp %83 : vector<4x128xf32>
    %cst_25 = arith.constant 1.000000e+00 : f32
    %85 = vector.broadcast %cst_25 : f32 to vector<4x128xf32>
    %86 = arith.addf %85, %84 : vector<4x128xf32>
    %87 = arith.divf %85, %86 : vector<4x128xf32>
    %88 = vector.extract_strided_slice %71 {offsets = [0, 256], sizes = [4, 128], strides = [1, 1]} : vector<4x384xf32> to vector<4x128xf32>
    %89 = vector.extract_strided_slice %70 {offsets = [0, 256], sizes = [4, 128], strides = [1, 1]} : vector<4x384xf32> to vector<4x128xf32>
    %90 = arith.mulf %79, %89 : vector<4x128xf32>
    %91 = arith.addf %88, %90 : vector<4x128xf32>
    %92 = math.tanh %91 : vector<4x128xf32>
    %cst_26 = arith.constant 1.000000e+00 : f32
    %93 = vector.broadcast %cst_26 : f32 to vector<4x128xf32>
    %94 = arith.subf %93, %87 : vector<4x128xf32>
    %95 = arith.mulf %94, %92 : vector<4x128xf32>
    %96 = arith.mulf %87, %66 : vector<4x128xf32>
    %97 = arith.addf %95, %96 : vector<4x128xf32>
    %98 = arith.truncf %97 : vector<4x128xf32> to vector<4x128xbf16>
    %c0_27 = arith.constant 0 : index
    %c384_28 = arith.constant 384 : index
    %99 = vector.load %arg1[%c0_27, %c384_28] : memref<128x768xbf16, #tpu.memory_space<vmem>>, vector<128x384xbf16>
    %cst_29 = arith.constant dense<0.000000e+00> : vector<4x384xf32>
    %100 = tpu.matmul %98, %99, %cst_29 {dimension_numbers = #tpu.dot_dimension_numbers<[1], [0], [0], [1], [0, 0, 1, 1], [], []>} : vector<4x128xbf16>, vector<128x384xbf16>, vector<4x384xf32> -> vector<4x384xf32>
    %101 = arith.addf %100, %34 : vector<4x384xf32>
    %102 = vector.extract_strided_slice %32 {offsets = [8, 0], sizes = [4, 384], strides = [1, 1]} : vector<16x384xf32> to vector<4x384xf32>
    %103 = vector.extract_strided_slice %102 {offsets = [0, 0], sizes = [4, 128], strides = [1, 1]} : vector<4x384xf32> to vector<4x128xf32>
    %104 = vector.extract_strided_slice %101 {offsets = [0, 0], sizes = [4, 128], strides = [1, 1]} : vector<4x384xf32> to vector<4x128xf32>
    %105 = arith.addf %103, %104 : vector<4x128xf32>
    %106 = arith.negf %105 : vector<4x128xf32>
    %107 = math.exp %106 : vector<4x128xf32>
    %cst_30 = arith.constant 1.000000e+00 : f32
    %108 = vector.broadcast %cst_30 : f32 to vector<4x128xf32>
    %109 = arith.addf %108, %107 : vector<4x128xf32>
    %110 = arith.divf %108, %109 : vector<4x128xf32>
    %111 = vector.extract_strided_slice %102 {offsets = [0, 128], sizes = [4, 128], strides = [1, 1]} : vector<4x384xf32> to vector<4x128xf32>
    %112 = vector.extract_strided_slice %101 {offsets = [0, 128], sizes = [4, 128], strides = [1, 1]} : vector<4x384xf32> to vector<4x128xf32>
    %113 = arith.addf %111, %112 : vector<4x128xf32>
    %114 = arith.negf %113 : vector<4x128xf32>
    %115 = math.exp %114 : vector<4x128xf32>
    %cst_31 = arith.constant 1.000000e+00 : f32
    %116 = vector.broadcast %cst_31 : f32 to vector<4x128xf32>
    %117 = arith.addf %116, %115 : vector<4x128xf32>
    %118 = arith.divf %116, %117 : vector<4x128xf32>
    %119 = vector.extract_strided_slice %102 {offsets = [0, 256], sizes = [4, 128], strides = [1, 1]} : vector<4x384xf32> to vector<4x128xf32>
    %120 = vector.extract_strided_slice %101 {offsets = [0, 256], sizes = [4, 128], strides = [1, 1]} : vector<4x384xf32> to vector<4x128xf32>
    %121 = arith.mulf %110, %120 : vector<4x128xf32>
    %122 = arith.addf %119, %121 : vector<4x128xf32>
    %123 = math.tanh %122 : vector<4x128xf32>
    %cst_32 = arith.constant 1.000000e+00 : f32
    %124 = vector.broadcast %cst_32 : f32 to vector<4x128xf32>
    %125 = arith.subf %124, %118 : vector<4x128xf32>
    %126 = arith.mulf %125, %123 : vector<4x128xf32>
    %127 = arith.mulf %118, %97 : vector<4x128xf32>
    %128 = arith.addf %126, %127 : vector<4x128xf32>
    %129 = arith.truncf %128 : vector<4x128xf32> to vector<4x128xbf16>
    %c0_33 = arith.constant 0 : index
    %c384_34 = arith.constant 384 : index
    %130 = vector.load %arg1[%c0_33, %c384_34] : memref<128x768xbf16, #tpu.memory_space<vmem>>, vector<128x384xbf16>
    %cst_35 = arith.constant dense<0.000000e+00> : vector<4x384xf32>
    %131 = tpu.matmul %129, %130, %cst_35 {dimension_numbers = #tpu.dot_dimension_numbers<[1], [0], [0], [1], [0, 0, 1, 1], [], []>} : vector<4x128xbf16>, vector<128x384xbf16>, vector<4x384xf32> -> vector<4x384xf32>
    %132 = arith.addf %131, %34 : vector<4x384xf32>
    %133 = vector.extract_strided_slice %32 {offsets = [12, 0], sizes = [4, 384], strides = [1, 1]} : vector<16x384xf32> to vector<4x384xf32>
    %134 = vector.extract_strided_slice %133 {offsets = [0, 0], sizes = [4, 128], strides = [1, 1]} : vector<4x384xf32> to vector<4x128xf32>
    %135 = vector.extract_strided_slice %132 {offsets = [0, 0], sizes = [4, 128], strides = [1, 1]} : vector<4x384xf32> to vector<4x128xf32>
    %136 = arith.addf %134, %135 : vector<4x128xf32>
    %137 = arith.negf %136 : vector<4x128xf32>
    %138 = math.exp %137 : vector<4x128xf32>
    %cst_36 = arith.constant 1.000000e+00 : f32
    %139 = vector.broadcast %cst_36 : f32 to vector<4x128xf32>
    %140 = arith.addf %139, %138 : vector<4x128xf32>
    %141 = arith.divf %139, %140 : vector<4x128xf32>
    %142 = vector.extract_strided_slice %133 {offsets = [0, 128], sizes = [4, 128], strides = [1, 1]} : vector<4x384xf32> to vector<4x128xf32>
    %143 = vector.extract_strided_slice %132 {offsets = [0, 128], sizes = [4, 128], strides = [1, 1]} : vector<4x384xf32> to vector<4x128xf32>
    %144 = arith.addf %142, %143 : vector<4x128xf32>
    %145 = arith.negf %144 : vector<4x128xf32>
    %146 = math.exp %145 : vector<4x128xf32>
    %cst_37 = arith.constant 1.000000e+00 : f32
    %147 = vector.broadcast %cst_37 : f32 to vector<4x128xf32>
    %148 = arith.addf %147, %146 : vector<4x128xf32>
    %149 = arith.divf %147, %148 : vector<4x128xf32>
    %150 = vector.extract_strided_slice %133 {offsets = [0, 256], sizes = [4, 128], strides = [1, 1]} : vector<4x384xf32> to vector<4x128xf32>
    %151 = vector.extract_strided_slice %132 {offsets = [0, 256], sizes = [4, 128], strides = [1, 1]} : vector<4x384xf32> to vector<4x128xf32>
    %152 = arith.mulf %141, %151 : vector<4x128xf32>
    %153 = arith.addf %150, %152 : vector<4x128xf32>
    %154 = math.tanh %153 : vector<4x128xf32>
    %cst_38 = arith.constant 1.000000e+00 : f32
    %155 = vector.broadcast %cst_38 : f32 to vector<4x128xf32>
    %156 = arith.subf %155, %149 : vector<4x128xf32>
    %157 = arith.mulf %156, %154 : vector<4x128xf32>
    %158 = arith.mulf %149, %128 : vector<4x128xf32>
    %159 = arith.addf %157, %158 : vector<4x128xf32>
    %160 = arith.truncf %159 : vector<4x128xf32> to vector<4x128xbf16>
    %c0_39 = arith.constant 0 : index
    %c384_40 = arith.constant 384 : index
    %161 = vector.load %arg1[%c0_39, %c384_40] : memref<128x768xbf16, #tpu.memory_space<vmem>>, vector<128x384xbf16>
    %cst_41 = arith.constant dense<0.000000e+00> : vector<4x384xf32>
    %162 = tpu.matmul %160, %161, %cst_41 {dimension_numbers = #tpu.dot_dimension_numbers<[1], [0], [0], [1], [0, 0, 1, 1], [], []>} : vector<4x128xbf16>, vector<128x384xbf16>, vector<4x384xf32> -> vector<4x384xf32>
    %163 = arith.addf %162, %34 : vector<4x384xf32>
    %164 = tpu.concatenate %163, %163 in 0 : vector<4x384xf32>, vector<4x384xf32> -> vector<8x384xf32>
    %165 = tpu.concatenate %159, %159 in 0 : vector<4x128xf32>, vector<4x128xf32> -> vector<8x128xf32>
    %166 = vector.extract_strided_slice %0 {offsets = [0, 0], sizes = [8, 128], strides = [1, 1]} : vector<8x384xf32> to vector<8x128xf32>
    %167 = vector.extract_strided_slice %164 {offsets = [0, 0], sizes = [8, 128], strides = [1, 1]} : vector<8x384xf32> to vector<8x128xf32>
    %168 = arith.addf %166, %167 : vector<8x128xf32>
    %169 = arith.negf %168 : vector<8x128xf32>
    %170 = math.exp %169 : vector<8x128xf32>
    %cst_42 = arith.constant 1.000000e+00 : f32
    %171 = vector.broadcast %cst_42 : f32 to vector<8x128xf32>
    %172 = arith.addf %171, %170 : vector<8x128xf32>
    %173 = arith.divf %171, %172 : vector<8x128xf32>
    %174 = vector.extract_strided_slice %0 {offsets = [0, 128], sizes = [8, 128], strides = [1, 1]} : vector<8x384xf32> to vector<8x128xf32>
    %175 = vector.extract_strided_slice %164 {offsets = [0, 128], sizes = [8, 128], strides = [1, 1]} : vector<8x384xf32> to vector<8x128xf32>
    %176 = arith.addf %174, %175 : vector<8x128xf32>
    %177 = arith.negf %176 : vector<8x128xf32>
    %178 = math.exp %177 : vector<8x128xf32>
    %cst_43 = arith.constant 1.000000e+00 : f32
    %179 = vector.broadcast %cst_43 : f32 to vector<8x128xf32>
    %180 = arith.addf %179, %178 : vector<8x128xf32>
    %181 = arith.divf %179, %180 : vector<8x128xf32>
    %182 = vector.extract_strided_slice %0 {offsets = [0, 256], sizes = [8, 128], strides = [1, 1]} : vector<8x384xf32> to vector<8x128xf32>
    %183 = vector.extract_strided_slice %164 {offsets = [0, 256], sizes = [8, 128], strides = [1, 1]} : vector<8x384xf32> to vector<8x128xf32>
    %184 = arith.mulf %173, %183 : vector<8x128xf32>
    %185 = arith.addf %182, %184 : vector<8x128xf32>
    %186 = math.tanh %185 : vector<8x128xf32>
    %cst_44 = arith.constant 1.000000e+00 : f32
    %187 = vector.broadcast %cst_44 : f32 to vector<8x128xf32>
    %188 = arith.subf %187, %181 : vector<8x128xf32>
    %189 = arith.mulf %188, %186 : vector<8x128xf32>
    %190 = arith.mulf %181, %165 : vector<8x128xf32>
    %191 = arith.addf %189, %190 : vector<8x128xf32>
    %c4 = arith.constant 4 : index
    %c0_45 = arith.constant 0 : index
    %192 = vector.load %arg2[%c4, %c0_45] : memref<8x128xbf16, #tpu.memory_space<vmem>>, vector<4x128xbf16>
    %193 = arith.truncf %191 : vector<8x128xf32> to vector<8x128xbf16>
    %cst_46 = arith.constant dense<0.000000e+00> : vector<4x8xf32>
    %194 = tpu.matmul %192, %193, %cst_46 {dimension_numbers = #tpu.dot_dimension_numbers<[1], [1], [0], [0], [0, 0, 1, 0], [], []>} : vector<4x128xbf16>, vector<8x128xbf16>, vector<4x8xf32> -> vector<4x8xf32>
    %195 = arith.addf %194, %4 : vector<4x8xf32>
    %196 = vector.extract_strided_slice %195 {offsets = [0, 0], sizes = [4, 4], strides = [1, 1]} : vector<4x8xf32> to vector<4x4xf32>
    %197 = vector.extract_strided_slice %195 {offsets = [0, 4], sizes = [4, 4], strides = [1, 1]} : vector<4x8xf32> to vector<4x4xf32>
    %198 = tpu.concatenate %196, %197 in 0 : vector<4x4xf32>, vector<4x4xf32> -> vector<8x4xf32>
    %199 = vector.broadcast %7 : vector<1x4xf32> to vector<8x4xf32>
    %200 = arith.addf %198, %199 : vector<8x4xf32>
    %201 = vector.shape_cast %200 : vector<8x4xf32> to vector<1x8x4xf32>
    %c0_47 = arith.constant 0 : index
    %c0_48 = arith.constant 0 : index
    %c0_49 = arith.constant 0 : index
    %202 = vector.load %arg4[%c0_47, %c0_48, %c0_49] : memref<1x8x4xf32, #tpu.memory_space<vmem>>, vector<1x8x4xf32>
    tpu.vector_store %arg4[%c0_47, %c0_48, %c0_49], %201 {strides = array<i32>} : memref<1x8x4xf32, #tpu.memory_space<vmem>>, vector<1x8x4xf32>,
    return
  }
}

</mosaic_0001>

<llo_original>
// kernel: segrnn_forward.1
$region0: #{segrnn_forward.1}
  #allocation0 [shape = 'u32[]', space=smem, size = 0x4, offset = 0x4, fixed_abs, tag = 'smem constant byte address 0x4 - core index']
  #allocation1 [shape = 'u32[144,128]{1,0:T(1,128)}', space=vmem, size = 0x12000, scoped, tag = 'internal scratch']
  %s0 = inlined_call_operand.vmem [shape: f32[1,16,4], index: 0, kind: input, shape index: {}]
  %s1 = inlined_call_operand.hbm [shape: bf16[128,768], index: 1, kind: input, shape index: {}]
  %s2 = inlined_call_operand.vmem [shape: bf16[8,128], index: 2, kind: input, shape index: {}]
  %s3 = inlined_call_operand.hbm [shape: f32[16,384], index: 3, kind: input, shape index: {}]
  %s4 = inlined_call_operand.vmem [shape: f32[1,8,4], index: 4, kind: output, shape index: {}]
  %s5 = sld [smem:[#allocation0]]
  $region34: #{segrnn_forward.1} parent=0
    _
  %s7 = ssub.s32 1, %s5
  %s8 = scalar_select 0, %s7, %s5
  $region1: #{segrnn_forward.1} parent=0
    #allocation2 [shape = 'u8[196608]{0}', space=vmem, size = 0x30000, scoped, tag = 'input window, operand 1, single buffered']
    #allocation3 [shape = 's32[1]{0}', space=sflag, size = 0x4, scoped, tag = 'scoped memory for segrnn_forward.1']
    #allocation4 [shape = 'u8[24576]{0}', space=vmem, size = 0x6000, scoped, tag = 'input window, operand 3, single buffered']
    #allocation5 [shape = 's32[1]{0}', space=sflag, size = 0x4, scoped, tag = 'scoped memory for segrnn_forward.1']
    %9 = vsyncpa [#allocation3], 0
    %10 = vsyncpa [#allocation5], 0
    // Predicated region
    $region2: #{segrnn_forward.1} parent=1 // pred_check
      _
    $region3: #{segrnn_forward.1} parent=1 // pred_check_branch
      %12 = sbr.rel (0) target = $region5
    $region4: #{segrnn_forward.1} parent=1 // pred_region
      _
    $region5: #{segrnn_forward.1} parent=1 // pred_fallthru
      _
    // Predicated region
    $region6: #{segrnn_forward.1} parent=1 // pred_check
      _
    $region7: #{segrnn_forward.1} parent=1 // pred_check_branch
      %14 = sbr.rel (0) target = $region9
    $region8: #{segrnn_forward.1} parent=1 // pred_region
      %s16 = ssub.s32 6144, 6144
      %17 = vsyncadd [#allocation3], %s16
      %s18 = sshll.u32 [#allocation2], 4
      %s19 = int_to_ptr.vmem [resolvable:$true] %s18
      %24 = dma.hbm_to_vmem [thread:$0]  %s1, 6144, %s19, [#allocation3], 384, 384, 24
    $region9: #{segrnn_forward.1} parent=1 // pred_fallthru
      _
    // Predicated region
    $region10: #{segrnn_forward.1} parent=1 // pred_check
      _
    $region11: #{segrnn_forward.1} parent=1 // pred_check_branch
      %26 = sbr.rel (0) target = $region13
    $region12: #{segrnn_forward.1} parent=1 // pred_region
      _
    $region13: #{segrnn_forward.1} parent=1 // pred_fallthru
      _
    // Predicated region
    $region14: #{segrnn_forward.1} parent=1 // pred_check
      _
    $region15: #{segrnn_forward.1} parent=1 // pred_check_branch
      %28 = sbr.rel (0) target = $region17
    $region16: #{segrnn_forward.1} parent=1 // pred_region
      %s30 = ssub.s32 768, 768
      %31 = vsyncadd [#allocation5], %s30
      %s32 = sshll.u32 [#allocation4], 4
      %s33 = int_to_ptr.vmem [resolvable:$true] %s32
      %38 = dma.hbm_to_vmem [thread:$0]  %s3, 768, %s33, [#allocation5], 384, 384, 24
    $region17: #{segrnn_forward.1} parent=1 // pred_fallthru
      _
    // Predicated region
    $region18: #{segrnn_forward.1} parent=1 // pred_check
      _
    $region19: #{segrnn_forward.1} parent=1 // pred_check_branch
      %40 = sbr.rel (0) target = $region21
    $region20: #{segrnn_forward.1} parent=1 // pred_region
      %41 = dma.done [#allocation3], 6144
    $region21: #{segrnn_forward.1} parent=1 // pred_fallthru
      _
    // Predicated region
    $region22: #{segrnn_forward.1} parent=1 // pred_check
      _
    $region23: #{segrnn_forward.1} parent=1 // pred_check_branch
      %43 = sbr.rel (0) target = $region25
    $region24: #{segrnn_forward.1} parent=1 // pred_region
      %44 = dma.done [#allocation5], 768
    $region25: #{segrnn_forward.1} parent=1 // pred_fallthru
      _
    %v46 = vld [vmem:[#allocation4] sm:$0xff]
    %v47 = vld [vmem:[#allocation4 + $0x8] sm:$0xff]
    %v48 = vld [vmem:[#allocation4 + $0x10] sm:$0xff]
    %v49 = vld [vmem:[#allocation4 + $0x18] ss:$0 sm:$0xff]
    %s50 = scalar_lea.vmem [#allocation4], 25
    %v51 = vld [vmem:[%s50] ss:$8 sm:$0x7]
    %s52 = scalar_lea.vmem [#allocation4], 26
    %v53 = vld [vmem:[%s52] ss:$8 sm:$0x7]
    %v54 = vld [vmem:[#allocation4 + $0x18] sm:$0x78]
    %v55 = vld [vmem:[%s0] sm:$0xff]
    %v56 = vld [vmem:[%s0 + $0x8] sm:$0xff]
    %v57 = vlaneseq
    %v58 = vshrl.u32 %v57, 7
    %v59 = vsub.s32 7, %v58
    %v60 = vrot.slane %v56, %v59
    %v61 = vsub.f32 %v55, %v60
    %v62 = vsub.f32 %v56, %v60
    %v63 = vlaneseq
    %v64 = vshrl.u32 %v63, 7
    %v65 = vlaneseq
    %v66 = vand.u32 %v65, 127
    %vm67 = vcmp.eq.s32.totalorder %v64, %v66
    %v68 = vsel %vm67, 1, 0
    %v69 = vcvt.s32.f32 %v68
    %vm70 = vcmask 31744
    %v72 = vsel %vm70, %v69, 0
    %v75 = vsel %vm70, %v61, 0
    %v78 = vsel %vm70, %v62, 0
    %80 = vmatprep.subr.mxu0 0.0
    %81 = vmatpush1.xpose.msra.mxu0 %v75
    %82 = vmatprep.subr.mxu0 0.0
    %83 = vmatpush1.xpose.msra.mxu0 %v78
    %84 = vmatprep.subr.mxu0 0.0
    %85 = vmatpush1.xpose.msra.mxu0 0.0
    %86 = vmatprep.subr.mxu0 0.0
    %87 = vmatpush1.xpose.msra.mxu0 0.0
    %88 = vmatprep.subr.mxu0 0.0
    %89 = vmatpush1.xpose.msra.mxu0 0.0
    %90 = vmatprep.subr.mxu0 0.0
    %91 = vmatpush1.xpose.msra.mxu0 0.0
    %92 = vmatprep.subr.mxu0 0.0
    %93 = vmatpush1.xpose.msra.mxu0 0.0
    %94 = vmatprep.subr.mxu0 0.0
    %95 = vmatpush1.xpose.msra.mxu0 0.0
    %96 = vmatprep.subr.mxu0 0.0
    %97 = vmatpush1.xpose.msra.mxu0 0.0
    %98 = vmatprep.subr.mxu0 0.0
    %99 = vmatpush1.xpose.msra.mxu0 0.0
    %100 = vmatprep.subr.mxu0 0.0
    %101 = vmatpush1.xpose.msra.mxu0 0.0
    %102 = vmatprep.subr.mxu0 0.0
    %103 = vmatpush1.xpose.msra.mxu0 0.0
    %104 = vmatprep.subr.mxu0 0.0
    %105 = vmatpush1.xpose.msra.mxu0 0.0
    %106 = vmatprep.subr.mxu0 0.0
    %107 = vmatpush1.xpose.msra.mxu0 0.0
    %108 = vmatprep.subr.mxu0 0.0
    %109 = vmatpush1.xpose.msra.mxu0 0.0
    %110 = vmatprep.subr.mxu0 0.0
    %111 = vmatpush1.xpose.msra.mxu0 0.0
    %112 = vmatprep.subr.mxu0 0.0
    %113 = vmatpush1.xpose.msra.mxu0 0.0
    %114 = vmatprep.subr.mxu0 0.0
    %115 = vmatpush1.xpose.msra.mxu0 0.0
    %116 = vmatprep.subr.mxu0 0.0
    %117 = vmatpush1.xpose.msra.mxu0 0.0
    %118 = vmatprep.subr.mxu0 0.0
    %119 = vmatpush1.xpose.msra.mxu0 0.0
    %120 = vmatprep.subr.mxu0 0.0
    %121 = vmatpush1.xpose.msra.mxu0 0.0
    %122 = vmatprep.subr.mxu0 0.0
    %123 = vmatpush1.xpose.msra.mxu0 0.0
    %124 = vmatprep.subr.mxu0 0.0
    %125 = vmatpush1.xpose.msra.mxu0 0.0
    %126 = vmatprep.subr.mxu0 0.0
    %127 = vmatpush1.xpose.msra.mxu0 0.0
    %128 = vmatprep.subr.mxu0 0.0
    %129 = vmatpush1.xpose.msra.mxu0 0.0
    %130 = vmatprep.subr.mxu0 0.0
    %131 = vmatpush1.xpose.msra.mxu0 0.0
    %132 = vmatprep.subr.mxu0 0.0
    %133 = vmatpush1.xpose.msra.mxu0 0.0
    %134 = vmatprep.subr.mxu0 0.0
    %135 = vmatpush1.xpose.msra.mxu0 0.0
    %136 = vmatprep.subr.mxu0 0.0
    %137 = vmatpush1.xpose.msra.mxu0 0.0
    %138 = vmatprep.subr.mxu0 0.0
    %139 = vmatpush1.xpose.msra.mxu0 0.0
    %140 = vmatprep.subr.mxu0 0.0
    %141 = vmatpush1.xpose.msra.mxu0 0.0
    %142 = vmatprep.subr.mxu0 0.0
    %143 = vmatpush1.xpose.msra.mxu0 0.0
    %144 = vmatprep.mubr.f32.mxu0 0.0
    %145 = vmatmul.mubr.f32.gmra.mrb[0].mxu0 %v72
    %v146 = vpop.f32.mrb[0].mxu0
    %v147 = vadd.f32 0.0, %v146
    %v148 = vpop.f32.mrb[0].mxu0
    %149 = vdwg.mxu0
    %v151 = vrot.slane %v147, 4
    %152 = vrot.lane.b32.xlu0 %v151, 124
    %v153 = vpop.permute.xlu0 %152
    %155 = vrot.lane.b32.xlu0 %v147, 120
    %v156 = vpop.permute.xlu0 %155
    %158 = vrot.lane.b32.xlu0 %v151, 116
    %v159 = vpop.permute.xlu0 %158
    %vm161 = vcmask 1043456
    %v162 = vsel %vm161, %v147, %v153
    %v163 = vsel %vm161, %v156, %v159
    %v164 = vld [vmem:[%s2] sm:$0x3]
    %v165 = vpack.c.bf16 %v163, %v162
    %v167 = vsel %vm70, %v165, 0
    %vm169 = vcmask 1041408
    %v171 = vsel %vm169, %v164, 0
    %173 = vmatprep.subr.bf16.mxu0 0
    %174 = vmatpush1.bf16.msra.mxu0 %v171
    %175 = vmatprep.subr.bf16.mxu0 0
    %176 = vmatpush1.bf16.msra.mxu0 0
    %177 = vmatprep.subr.bf16.mxu0 0
    %178 = vmatpush1.bf16.msra.mxu0 0
    %179 = vmatprep.subr.bf16.mxu0 0
    %180 = vmatpush1.bf16.msra.mxu0 0
    %181 = vmatprep.subr.bf16.mxu0 0
    %182 = vmatpush1.bf16.msra.mxu0 0
    %183 = vmatprep.subr.bf16.mxu0 0
    %184 = vmatpush1.bf16.msra.mxu0 0
    %185 = vmatprep.subr.bf16.mxu0 0
    %186 = vmatpush1.bf16.msra.mxu0 0
    %187 = vmatprep.subr.bf16.mxu0 0
    %188 = vmatpush1.bf16.msra.mxu0 0
    %189 = vmatprep.subr.bf16.mxu0 0
    %190 = vmatpush1.bf16.msra.mxu0 0
    %191 = vmatprep.subr.bf16.mxu0 0
    %192 = vmatpush1.bf16.msra.mxu0 0
    %193 = vmatprep.subr.bf16.mxu0 0
    %194 = vmatpush1.bf16.msra.mxu0 0
    %195 = vmatprep.subr.bf16.mxu0 0
    %196 = vmatpush1.bf16.msra.mxu0 0
    %197 = vmatprep.subr.bf16.mxu0 0
    %198 = vmatpush1.bf16.msra.mxu0 0
    %199 = vmatprep.subr.bf16.mxu0 0
    %200 = vmatpush1.bf16.msra.mxu0 0
    %201 = vmatprep.subr.bf16.mxu0 0
    %202 = vmatpush1.bf16.msra.mxu0 0
    %203 = vmatprep.subr.bf16.mxu0 0
    %204 = vmatpush1.bf16.msra.mxu0 0
    %205 = vmatprep.mubr.bf16.mxu0 0
    %206 = vmatmul.mubr.bf16.gmra.mrb[0].mxu0 %v167
    %v207 = vpop.f32.mrb[0].mxu0
    %v208 = vadd.f32 %v49, %v207
    %v209 = vpop.f32.mrb[0].mxu0
    %v210 = vpop.f32.mrb[0].mxu0
    %v211 = vadd.f32 %v49, %v210
    %v212 = vpop.f32.mrb[0].mxu0
    %213 = vdwg.mxu0
    %v214 = vmax.f32 %v208, 0.0
    %v215 = vmax.f32 %v211, 0.0
    %v216 = vpack.c.bf16 %v215, %v214
    %v217 = vld [vmem:[#allocation2] sm:$0xff]
    %v218 = vld [vmem:[#allocation2 + $0x8] sm:$0xf]
    %v219 = vld [vmem:[#allocation2 + $0x18] sm:$0xff]
    %v220 = vld [vmem:[#allocation2 + $0x20] sm:$0xf]
    %v221 = vld [vmem:[#allocation2 + $0x30] sm:$0xff]
    %v222 = vld [vmem:[#allocation2 + $0x38] sm:$0xf]
    %v223 = vld [vmem:[#allocation2 + $0x48] sm:$0xff]
    %v224 = vld [vmem:[#allocation2 + $0x50] sm:$0xf]
    %v225 = vld [vmem:[#allocation2 + $0x60] sm:$0xff]
    %v226 = vld [vmem:[#allocation2 + $0x68] sm:$0xf]
    %v227 = vld [vmem:[#allocation2 + $0x78] sm:$0xff]
    %v228 = vld [vmem:[#allocation2 + $0x80] sm:$0xf]
    %v229 = vld [vmem:[#allocation2 + $0x90] sm:$0xff]
    %v230 = vld [vmem:[#allocation2 + $0x98] sm:$0xf]
    %v231 = vld [vmem:[#allocation2 + $0xa8] sm:$0xff]
    %v232 = vld [vmem:[#allocation2 + $0xb0] sm:$0xf]
    %v233 = vld [vmem:[#allocation2 + $0xc0] sm:$0xff]
    %v234 = vld [vmem:[#allocation2 + $0xc8] sm:$0xf]
    %v235 = vld [vmem:[#allocation2 + $0xd8] sm:$0xff]
    %v236 = vld [vmem:[#allocation2 + $0xe0] sm:$0xf]
    %v237 = vld [vmem:[#allocation2 + $0xf0] sm:$0xff]
    %v238 = vld [vmem:[#allocation2 + $0xf8] sm:$0xf]
    %v239 = vld [vmem:[#allocation2 + $0x108] sm:$0xff]
    %v240 = vld [vmem:[#allocation2 + $0x110] sm:$0xf]
    %v241 = vld [vmem:[#allocation2 + $0x120] sm:$0xff]
    %v242 = vld [vmem:[#allocation2 + $0x128] sm:$0xf]
    %v243 = vld [vmem:[#allocation2 + $0x138] sm:$0xff]
    %v244 = vld [vmem:[#allocation2 + $0x140] sm:$0xf]
    %v245 = vld [vmem:[#allocation2 + $0x150] sm:$0xff]
    %v246 = vld [vmem:[#allocation2 + $0x158] sm:$0xf]
    %v247 = vld [vmem:[#allocation2 + $0x168] sm:$0xff]
    %v248 = vld [vmem:[#allocation2 + $0x170] sm:$0xf]
    %v250 = vlaneseq
    %v251 = vshrl.u32 %v250, 7
    %v252 = vsub.s32 0, %v251
    %v253 = vrot.slane %v51, %v252
    %v254 = vlaneseq
    %v255 = vshrl.u32 %v254, 7
    %v256 = vsub.s32 1, %v255
    %v257 = vrot.slane %v51, %v256
    %v258 = vlaneseq
    %v259 = vshrl.u32 %v258, 7
    %v260 = vsub.s32 2, %v259
    %v261 = vrot.slane %v51, %v260
    %v297 = vunpack.c.l.b16 %v217
    %v298 = vunpack.c.h.b16 %v217
    %v299 = vunpack.c.l.b16 %v218
    %v300 = vunpack.c.l.b16 %v219
    %v301 = vunpack.c.h.b16 %v219
    %v302 = vunpack.c.l.b16 %v220
    %v303 = vunpack.c.l.b16 %v221
    %v304 = vunpack.c.h.b16 %v221
    %v305 = vunpack.c.l.b16 %v222
    %v306 = vunpack.c.l.b16 %v223
    %v307 = vunpack.c.h.b16 %v223
    %v308 = vunpack.c.l.b16 %v224
    %v309 = vunpack.c.l.b16 %v225
    %v310 = vunpack.c.h.b16 %v225
    %v311 = vunpack.c.l.b16 %v226
    %v312 = vunpack.c.l.b16 %v227
    %v313 = vunpack.c.h.b16 %v227
    %v314 = vunpack.c.l.b16 %v228
    %v315 = vunpack.c.l.b16 %v229
    %v316 = vunpack.c.h.b16 %v229
    %v317 = vunpack.c.l.b16 %v230
    %v318 = vunpack.c.l.b16 %v231
    %v319 = vunpack.c.h.b16 %v231
    %v320 = vunpack.c.l.b16 %v232
    %v321 = vunpack.c.l.b16 %v233
    %v322 = vunpack.c.h.b16 %v233
    %v323 = vunpack.c.l.b16 %v234
    %v324 = vunpack.c.l.b16 %v235
    %v325 = vunpack.c.h.b16 %v235
    %v326 = vunpack.c.l.b16 %v236
    %v327 = vunpack.c.l.b16 %v237
    %v328 = vunpack.c.h.b16 %v237
    %v329 = vunpack.c.l.b16 %v238
    %v330 = vunpack.c.l.b16 %v239
    %v331 = vunpack.c.h.b16 %v239
    %v332 = vunpack.c.l.b16 %v240
    %v333 = vunpack.c.l.b16 %v241
    %v334 = vunpack.c.h.b16 %v241
    %v335 = vunpack.c.l.b16 %v242
    %v336 = vunpack.c.l.b16 %v243
    %v337 = vunpack.c.h.b16 %v243
    %v338 = vunpack.c.l.b16 %v244
    %v339 = vunpack.c.l.b16 %v245
    %v340 = vunpack.c.h.b16 %v245
    %v341 = vunpack.c.l.b16 %v246
    %v342 = vunpack.c.l.b16 %v247
    %v343 = vunpack.c.h.b16 %v247
    %v344 = vunpack.c.l.b16 %v248
    %v345 = vpack.c.b16 %v300, %v297
    %v346 = vpack.c.b16 %v301, %v298
    %v347 = vpack.c.b16 %v302, %v299
    %v348 = vpack.c.b16 %v306, %v303
    %v349 = vpack.c.b16 %v307, %v304
    %v350 = vpack.c.b16 %v308, %v305
    %v351 = vpack.c.b16 %v312, %v309
    %v352 = vpack.c.b16 %v313, %v310
    %v353 = vpack.c.b16 %v314, %v311
    %v354 = vpack.c.b16 %v318, %v315
    %v355 = vpack.c.b16 %v319, %v316
    %v356 = vpack.c.b16 %v320, %v317
    %v357 = vpack.c.b16 %v324, %v321
    %v358 = vpack.c.b16 %v325, %v322
    %v359 = vpack.c.b16 %v326, %v323
    %v360 = vpack.c.b16 %v330, %v327
    %v361 = vpack.c.b16 %v331, %v328
    %v362 = vpack.c.b16 %v332, %v329
    %v363 = vpack.c.b16 %v336, %v333
    %v364 = vpack.c.b16 %v337, %v334
    %v365 = vpack.c.b16 %v338, %v335
    %v366 = vpack.c.b16 %v342, %v339
    %v367 = vpack.c.b16 %v343, %v340
    %v368 = vpack.c.b16 %v344, %v341
    %393 = vmatprep.subr.bf16.mxu0 %v346
    %394 = vmatpush1.bf16.msra.mxu0 %v345
    %395 = vmatprep.subr.bf16.mxu0 %v349
    %396 = vmatpush1.bf16.msra.mxu0 %v348
    %397 = vmatprep.subr.bf16.mxu0 %v352
    %398 = vmatpush1.bf16.msra.mxu0 %v351
    %399 = vmatprep.subr.bf16.mxu0 %v355
    %400 = vmatpush1.bf16.msra.mxu0 %v354
    %401 = vmatprep.subr.bf16.mxu0 %v358
    %402 = vmatpush1.bf16.msra.mxu0 %v357
    %403 = vmatprep.subr.bf16.mxu0 %v361
    %404 = vmatpush1.bf16.msra.mxu0 %v360
    %405 = vmatprep.subr.bf16.mxu0 %v364
    %406 = vmatpush1.bf16.msra.mxu0 %v363
    %407 = vmatprep.subr.bf16.mxu0 %v367
    %408 = vmatpush1.bf16.msra.mxu0 %v366
    %409 = vmatprep.subr.bf16.mxu0 0
    %410 = vmatpush1.bf16.msra.mxu0 0
    %411 = vmatprep.subr.bf16.mxu0 0
    %412 = vmatpush1.bf16.msra.mxu0 0
    %413 = vmatprep.subr.bf16.mxu0 0
    %414 = vmatpush1.bf16.msra.mxu0 0
    %415 = vmatprep.subr.bf16.mxu0 0
    %416 = vmatpush1.bf16.msra.mxu0 0
    %417 = vmatprep.subr.bf16.mxu0 0
    %418 = vmatpush1.bf16.msra.mxu0 0
    %419 = vmatprep.subr.bf16.mxu0 0
    %420 = vmatpush1.bf16.msra.mxu0 0
    %421 = vmatprep.subr.bf16.mxu0 0
    %422 = vmatpush1.bf16.msra.mxu0 0
    %423 = vmatprep.subr.bf16.mxu0 0
    %424 = vmatpush1.bf16.msra.mxu0 0
    %425 = vmatprep.mubr.bf16.mxu0 0
    %426 = vmatmul.mubr.bf16.gmra.mrb[0].mxu0 %v216
    %v427 = vpop.f32.mrb[0].mxu0
    %v428 = vadd.f32 %v253, %v427
    %v429 = vpop.f32.mrb[0].mxu0
    %v430 = vadd.f32 %v257, %v429
    %v431 = vpop.f32.mrb[0].mxu0
    %v432 = vadd.f32 %v253, %v431
    %v433 = vpop.f32.mrb[0].mxu0
    %v434 = vadd.f32 %v257, %v433
    %435 = vdwg.mxu0
    %436 = vmatprep.subr.bf16.mxu0 0
    %437 = vmatpush1.bf16.msra.mxu0 %v347
    %438 = vmatprep.subr.bf16.mxu0 0
    %439 = vmatpush1.bf16.msra.mxu0 %v350
    %440 = vmatprep.subr.bf16.mxu0 0
    %441 = vmatpush1.bf16.msra.mxu0 %v353
    %442 = vmatprep.subr.bf16.mxu0 0
    %443 = vmatpush1.bf16.msra.mxu0 %v356
    %444 = vmatprep.subr.bf16.mxu0 0
    %445 = vmatpush1.bf16.msra.mxu0 %v359
    %446 = vmatprep.subr.bf16.mxu0 0
    %447 = vmatpush1.bf16.msra.mxu0 %v362
    %448 = vmatprep.subr.bf16.mxu0 0
    %449 = vmatpush1.bf16.msra.mxu0 %v365
    %450 = vmatprep.subr.bf16.mxu0 0
    %451 = vmatpush1.bf16.msra.mxu0 %v368
    %452 = vmatprep.subr.bf16.mxu0 0
    %453 = vmatpush1.bf16.msra.mxu0 0
    %454 = vmatprep.subr.bf16.mxu0 0
    %455 = vmatpush1.bf16.msra.mxu0 0
    %456 = vmatprep.subr.bf16.mxu0 0
    %457 = vmatpush1.bf16.msra.mxu0 0
    %458 = vmatprep.subr.bf16.mxu0 0
    %459 = vmatpush1.bf16.msra.mxu0 0
    %460 = vmatprep.subr.bf16.mxu0 0
    %461 = vmatpush1.bf16.msra.mxu0 0
    %462 = vmatprep.subr.bf16.mxu0 0
    %463 = vmatpush1.bf16.msra.mxu0 0
    %464 = vmatprep.subr.bf16.mxu0 0
    %465 = vmatpush1.bf16.msra.mxu0 0
    %466 = vmatprep.subr.bf16.mxu0 0
    %467 = vmatpush1.bf16.msra.mxu0 0
    %468 = vmatprep.mubr.bf16.mxu0 0
    %469 = vmatmul.mubr.bf16.gmra.mrb[0].mxu0 %v216
    %v470 = vpop.f32.mrb[0].mxu0
    %v471 = vadd.f32 %v261, %v470
    %v472 = vpop.f32.mrb[0].mxu0
    %v473 = vpop.f32.mrb[0].mxu0
    %v474 = vadd.f32 %v261, %v473
    %v475 = vpop.f32.mrb[0].mxu0
    %476 = vdwg.mxu0
    %v478 = vlaneseq
    %v479 = vshrl.u32 %v478, 7
    %v480 = vsub.s32 0, %v479
    %v481 = vrot.slane %v53, %v480
    %v482 = vlaneseq
    %v483 = vshrl.u32 %v482, 7
    %v484 = vsub.s32 1, %v483
    %v485 = vrot.slane %v53, %v484
    %v486 = vlaneseq
    %v487 = vshrl.u32 %v486, 7
    %v488 = vsub.s32 2, %v487
    %v489 = vrot.slane %v53, %v488
    %v493 = vld [vmem:[#allocation2 + $0xc] sm:$0xff]
    %v494 = vld [vmem:[#allocation2 + $0x14] sm:$0xf]
    %v495 = vld [vmem:[#allocation2 + $0x24] sm:$0xff]
    %v496 = vld [vmem:[#allocation2 + $0x2c] sm:$0xf]
    %v497 = vld [vmem:[#allocation2 + $0x3c] sm:$0xff]
    %v498 = vld [vmem:[#allocation2 + $0x44] sm:$0xf]
    %v499 = vld [vmem:[#allocation2 + $0x54] sm:$0xff]
    %v500 = vld [vmem:[#allocation2 + $0x5c] sm:$0xf]
    %v501 = vld [vmem:[#allocation2 + $0x6c] sm:$0xff]
    %v502 = vld [vmem:[#allocation2 + $0x74] sm:$0xf]
    %v503 = vld [vmem:[#allocation2 + $0x84] sm:$0xff]
    %v504 = vld [vmem:[#allocation2 + $0x8c] sm:$0xf]
    %v505 = vld [vmem:[#allocation2 + $0x9c] sm:$0xff]
    %v506 = vld [vmem:[#allocation2 + $0xa4] sm:$0xf]
    %v507 = vld [vmem:[#allocation2 + $0xb4] sm:$0xff]
    %v508 = vld [vmem:[#allocation2 + $0xbc] sm:$0xf]
    %v509 = vld [vmem:[#allocation2 + $0xcc] sm:$0xff]
    %v510 = vld [vmem:[#allocation2 + $0xd4] sm:$0xf]
    %v511 = vld [vmem:[#allocation2 + $0xe4] sm:$0xff]
    %v512 = vld [vmem:[#allocation2 + $0xec] sm:$0xf]
    %v513 = vld [vmem:[#allocation2 + $0xfc] sm:$0xff]
    %v514 = vld [vmem:[#allocation2 + $0x104] sm:$0xf]
    %v515 = vld [vmem:[#allocation2 + $0x114] sm:$0xff]
    %v516 = vld [vmem:[#allocation2 + $0x11c] sm:$0xf]
    %v517 = vld [vmem:[#allocation2 + $0x12c] sm:$0xff]
    %v518 = vld [vmem:[#allocation2 + $0x134] sm:$0xf]
    %v519 = vld [vmem:[#allocation2 + $0x144] sm:$0xff]
    %v520 = vld [vmem:[#allocation2 + $0x14c] sm:$0xf]
    %v521 = vld [vmem:[#allocation2 + $0x15c] sm:$0xff]
    %v522 = vld [vmem:[#allocation2 + $0x164] sm:$0xf]
    %v523 = vld [vmem:[#allocation2 + $0x174] sm:$0xff]
    %v524 = vld [vmem:[#allocation2 + $0x17c] sm:$0xf]
    %v557 = vunpack.c.l.b16 %v493
    %v558 = vunpack.c.h.b16 %v493
    %v559 = vunpack.c.l.b16 %v494
    %v560 = vunpack.c.l.b16 %v495
    %v561 = vunpack.c.h.b16 %v495
    %v562 = vunpack.c.l.b16 %v496
    %v563 = vunpack.c.l.b16 %v497
    %v564 = vunpack.c.h.b16 %v497
    %v565 = vunpack.c.l.b16 %v498
    %v566 = vunpack.c.l.b16 %v499
    %v567 = vunpack.c.h.b16 %v499
    %v568 = vunpack.c.l.b16 %v500
    %v569 = vunpack.c.l.b16 %v501
    %v570 = vunpack.c.h.b16 %v501
    %v571 = vunpack.c.l.b16 %v502
    %v572 = vunpack.c.l.b16 %v503
    %v573 = vunpack.c.h.b16 %v503
    %v574 = vunpack.c.l.b16 %v504
    %v575 = vunpack.c.l.b16 %v505
    %v576 = vunpack.c.h.b16 %v505
    %v577 = vunpack.c.l.b16 %v506
    %v578 = vunpack.c.l.b16 %v507
    %v579 = vunpack.c.h.b16 %v507
    %v580 = vunpack.c.l.b16 %v508
    %v581 = vunpack.c.l.b16 %v509
    %v582 = vunpack.c.h.b16 %v509
    %v583 = vunpack.c.l.b16 %v510
    %v584 = vunpack.c.l.b16 %v511
    %v585 = vunpack.c.h.b16 %v511
    %v586 = vunpack.c.l.b16 %v512
    %v587 = vunpack.c.l.b16 %v513
    %v588 = vunpack.c.h.b16 %v513
    %v589 = vunpack.c.l.b16 %v514
    %v590 = vunpack.c.l.b16 %v515
    %v591 = vunpack.c.h.b16 %v515
    %v592 = vunpack.c.l.b16 %v516
    %v593 = vunpack.c.l.b16 %v517
    %v594 = vunpack.c.h.b16 %v517
    %v595 = vunpack.c.l.b16 %v518
    %v596 = vunpack.c.l.b16 %v519
    %v597 = vunpack.c.h.b16 %v519
    %v598 = vunpack.c.l.b16 %v520
    %v599 = vunpack.c.l.b16 %v521
    %v600 = vunpack.c.h.b16 %v521
    %v601 = vunpack.c.l.b16 %v522
    %v602 = vunpack.c.l.b16 %v523
    %v603 = vunpack.c.h.b16 %v523
    %v604 = vunpack.c.l.b16 %v524
    %v605 = vpack.c.b16 %v560, %v557
    %v606 = vpack.c.b16 %v561, %v558
    %v607 = vpack.c.b16 %v562, %v559
    %v608 = vpack.c.b16 %v566, %v563
    %v609 = vpack.c.b16 %v567, %v564
    %v610 = vpack.c.b16 %v568, %v565
    %v611 = vpack.c.b16 %v572, %v569
    %v612 = vpack.c.b16 %v573, %v570
    %v613 = vpack.c.b16 %v574, %v571
    %v614 = vpack.c.b16 %v578, %v575
    %v615 = vpack.c.b16 %v579, %v576
    %v616 = vpack.c.b16 %v580, %v577
    %v617 = vpack.c.b16 %v584, %v581
    %v618 = vpack.c.b16 %v585, %v582
    %v619 = vpack.c.b16 %v586, %v583
    %v620 = vpack.c.b16 %v590, %v587
    %v621 = vpack.c.b16 %v591, %v588
    %v622 = vpack.c.b16 %v592, %v589
    %v623 = vpack.c.b16 %v596, %v593
    %v624 = vpack.c.b16 %v597, %v594
    %v625 = vpack.c.b16 %v598, %v595
    %v626 = vpack.c.b16 %v602, %v599
    %v627 = vpack.c.b16 %v603, %v600
    %v628 = vpack.c.b16 %v604, %v601
    %653 = vmatprep.subr.bf16.mxu0 %v606
    %654 = vmatpush1.bf16.msra.mxu0 %v605
    %655 = vmatprep.subr.bf16.mxu0 %v609
    %656 = vmatpush1.bf16.msra.mxu0 %v608
    %657 = vmatprep.subr.bf16.mxu0 %v612
    %658 = vmatpush1.bf16.msra.mxu0 %v611
    %659 = vmatprep.subr.bf16.mxu0 %v615
    %660 = vmatpush1.bf16.msra.mxu0 %v614
    %661 = vmatprep.subr.bf16.mxu0 %v618
    %662 = vmatpush1.bf16.msra.mxu0 %v617
    %663 = vmatprep.subr.bf16.mxu0 %v621
    %664 = vmatpush1.bf16.msra.mxu0 %v620
    %665 = vmatprep.subr.bf16.mxu0 %v624
    %666 = vmatpush1.bf16.msra.mxu0 %v623
    %667 = vmatprep.subr.bf16.mxu0 %v627
    %668 = vmatpush1.bf16.msra.mxu0 %v626
    %669 = vmatprep.subr.bf16.mxu0 0
    %670 = vmatpush1.bf16.msra.mxu0 0
    %671 = vmatprep.subr.bf16.mxu0 0
    %672 = vmatpush1.bf16.msra.mxu0 0
    %673 = vmatprep.subr.bf16.mxu0 0
    %674 = vmatpush1.bf16.msra.mxu0 0
    %675 = vmatprep.subr.bf16.mxu0 0
    %676 = vmatpush1.bf16.msra.mxu0 0
    %677 = vmatprep.subr.bf16.mxu0 0
    %678 = vmatpush1.bf16.msra.mxu0 0
    %679 = vmatprep.subr.bf16.mxu0 0
    %680 = vmatpush1.bf16.msra.mxu0 0
    %681 = vmatprep.subr.bf16.mxu0 0
    %682 = vmatpush1.bf16.msra.mxu0 0
    %683 = vmatprep.subr.bf16.mxu0 0
    %684 = vmatpush1.bf16.msra.mxu0 0
    %685 = vmatprep.mubr.bf16.mxu0 0
    %686 = vmatmul.mubr.bf16.gmra.mrb[0].mxu0 0
    %v687 = vpop.f32.mrb[0].mxu0
    %v688 = vadd.f32 %v481, %v687
    %v689 = vpop.f32.mrb[0].mxu0
    %v690 = vadd.f32 %v485, %v689
    %v691 = vpop.f32.mrb[0].mxu0
    %v692 = vpop.f32.mrb[0].mxu0
    %693 = vdwg.mxu0
    %694 = vmatprep.subr.bf16.mxu0 0
    %695 = vmatpush1.bf16.msra.mxu0 %v607
    %696 = vmatprep.subr.bf16.mxu0 0
    %697 = vmatpush1.bf16.msra.mxu0 %v610
    %698 = vmatprep.subr.bf16.mxu0 0
    %699 = vmatpush1.bf16.msra.mxu0 %v613
    %700 = vmatprep.subr.bf16.mxu0 0
    %701 = vmatpush1.bf16.msra.mxu0 %v616
    %702 = vmatprep.subr.bf16.mxu0 0
    %703 = vmatpush1.bf16.msra.mxu0 %v619
    %704 = vmatprep.subr.bf16.mxu0 0
    %705 = vmatpush1.bf16.msra.mxu0 %v622
    %706 = vmatprep.subr.bf16.mxu0 0
    %707 = vmatpush1.bf16.msra.mxu0 %v625
    %708 = vmatprep.subr.bf16.mxu0 0
    %709 = vmatpush1.bf16.msra.mxu0 %v628
    %710 = vmatprep.subr.bf16.mxu0 0
    %711 = vmatpush1.bf16.msra.mxu0 0
    %712 = vmatprep.subr.bf16.mxu0 0
    %713 = vmatpush1.bf16.msra.mxu0 0
    %714 = vmatprep.subr.bf16.mxu0 0
    %715 = vmatpush1.bf16.msra.mxu0 0
    %716 = vmatprep.subr.bf16.mxu0 0
    %717 = vmatpush1.bf16.msra.mxu0 0
    %718 = vmatprep.subr.bf16.mxu0 0
    %719 = vmatpush1.bf16.msra.mxu0 0
    %720 = vmatprep.subr.bf16.mxu0 0
    %721 = vmatpush1.bf16.msra.mxu0 0
    %722 = vmatprep.subr.bf16.mxu0 0
    %723 = vmatpush1.bf16.msra.mxu0 0
    %724 = vmatprep.subr.bf16.mxu0 0
    %725 = vmatpush1.bf16.msra.mxu0 0
    %726 = vmatprep.mubr.bf16.mxu0 0
    %727 = vmatmul.mubr.bf16.gmra.mrb[0].mxu0 0
    %v728 = vpop.f32.mrb[0].mxu0
    %v729 = vadd.f32 %v489, %v728
    %v730 = vpop.f32.mrb[0].mxu0
    %v731 = vpop.f32.mrb[0].mxu0
    %v732 = vpop.f32.mrb[0].mxu0
    %733 = vdwg.mxu0
    %v734 = vadd.f32 %v428, %v688
    %v735 = vxor.u32 %v734, 2147483648
    %v736 = vmul.f32 %v735, 1.442695
    %v737 = vpow.pop %v736
    %v738 = vadd.f32 %v737, 1.0
    %v739 = vrcp.pop %v738
    %v740 = vmul.f32 1.0, %v739
    %v741 = vadd.f32 %v430, %v690
    %v742 = vxor.u32 %v741, 2147483648
    %v743 = vmul.f32 %v742, 1.442695
    %v744 = vpow.pop %v743
    %v745 = vadd.f32 %v744, 1.0
    %v746 = vrcp.pop %v745
    %v747 = vmul.f32 1.0, %v746
    %v748 = vmul.f32 %v740, %v729
    %v749 = vadd.f32 %v471, %v748
    %v750 = vtanh.pop %v749
    %v751 = vsub.f32 1.0, %v747
    %v752 = vmul.f32 %v751, %v750
    %v753 = vmul.f32 %v747, 0.0
    %v754 = vadd.f32 %v752, %v753
    %v755 = vpack.c.bf16 %v754, %v754
    %756 = vmatprep.subr.bf16.mxu0 %v606
    %757 = vmatpush1.bf16.msra.mxu0 %v605
    %758 = vmatprep.subr.bf16.mxu0 %v609
    %759 = vmatpush1.bf16.msra.mxu0 %v608
    %760 = vmatprep.subr.bf16.mxu0 %v612
    %761 = vmatpush1.bf16.msra.mxu0 %v611
    %762 = vmatprep.subr.bf16.mxu0 %v615
    %763 = vmatpush1.bf16.msra.mxu0 %v614
    %764 = vmatprep.subr.bf16.mxu0 %v618
    %765 = vmatpush1.bf16.msra.mxu0 %v617
    %766 = vmatprep.subr.bf16.mxu0 %v621
    %767 = vmatpush1.bf16.msra.mxu0 %v620
    %768 = vmatprep.subr.bf16.mxu0 %v624
    %769 = vmatpush1.bf16.msra.mxu0 %v623
    %770 = vmatprep.subr.bf16.mxu0 %v627
    %771 = vmatpush1.bf16.msra.mxu0 %v626
    %772 = vmatprep.subr.bf16.mxu0 0
    %773 = vmatpush1.bf16.msra.mxu0 0
    %774 = vmatprep.subr.bf16.mxu0 0
    %775 = vmatpush1.bf16.msra.mxu0 0
    %776 = vmatprep.subr.bf16.mxu0 0
    %777 = vmatpush1.bf16.msra.mxu0 0
    %778 = vmatprep.subr.bf16.mxu0 0
    %779 = vmatpush1.bf16.msra.mxu0 0
    %780 = vmatprep.subr.bf16.mxu0 0
    %781 = vmatpush1.bf16.msra.mxu0 0
    %782 = vmatprep.subr.bf16.mxu0 0
    %783 = vmatpush1.bf16.msra.mxu0 0
    %784 = vmatprep.subr.bf16.mxu0 0
    %785 = vmatpush1.bf16.msra.mxu0 0
    %786 = vmatprep.subr.bf16.mxu0 0
    %787 = vmatpush1.bf16.msra.mxu0 0
    %788 = vmatprep.mubr.bf16.mxu0 0
    %789 = vmatmul.mubr.bf16.gmra.mrb[0].mxu0 %v755
    %v790 = vpop.f32.mrb[0].mxu0
    %v791 = vadd.f32 %v481, %v790
    %v792 = vpop.f32.mrb[0].mxu0
    %v793 = vadd.f32 %v485, %v792
    %v794 = vpop.f32.mrb[0].mxu0
    %v795 = vpop.f32.mrb[0].mxu0
    %796 = vdwg.mxu0
    %797 = vmatprep.subr.bf16.mxu0 0
    %798 = vmatpush1.bf16.msra.mxu0 %v607
    %799 = vmatprep.subr.bf16.mxu0 0
    %800 = vmatpush1.bf16.msra.mxu0 %v610
    %801 = vmatprep.subr.bf16.mxu0 0
    %802 = vmatpush1.bf16.msra.mxu0 %v613
    %803 = vmatprep.subr.bf16.mxu0 0
    %804 = vmatpush1.bf16.msra.mxu0 %v616
    %805 = vmatprep.subr.bf16.mxu0 0
    %806 = vmatpush1.bf16.msra.mxu0 %v619
    %807 = vmatprep.subr.bf16.mxu0 0
    %808 = vmatpush1.bf16.msra.mxu0 %v622
    %809 = vmatprep.subr.bf16.mxu0 0
    %810 = vmatpush1.bf16.msra.mxu0 %v625
    %811 = vmatprep.subr.bf16.mxu0 0
    %812 = vmatpush1.bf16.msra.mxu0 %v628
    %813 = vmatprep.subr.bf16.mxu0 0
    %814 = vmatpush1.bf16.msra.mxu0 0
    %815 = vmatprep.subr.bf16.mxu0 0
    %816 = vmatpush1.bf16.msra.mxu0 0
    %817 = vmatprep.subr.bf16.mxu0 0
    %818 = vmatpush1.bf16.msra.mxu0 0
    %819 = vmatprep.subr.bf16.mxu0 0
    %820 = vmatpush1.bf16.msra.mxu0 0
    %821 = vmatprep.subr.bf16.mxu0 0
    %822 = vmatpush1.bf16.msra.mxu0 0
    %823 = vmatprep.subr.bf16.mxu0 0
    %824 = vmatpush1.bf16.msra.mxu0 0
    %825 = vmatprep.subr.bf16.mxu0 0
    %826 = vmatpush1.bf16.msra.mxu0 0
    %827 = vmatprep.subr.bf16.mxu0 0
    %828 = vmatpush1.bf16.msra.mxu0 0
    %829 = vmatprep.mubr.bf16.mxu0 0
    %830 = vmatmul.mubr.bf16.gmra.mrb[0].mxu0 %v755
    %v831 = vpop.f32.mrb[0].mxu0
    %v832 = vadd.f32 %v489, %v831
    %v833 = vpop.f32.mrb[0].mxu0
    %v834 = vpop.f32.mrb[0].mxu0
    %v835 = vpop.f32.mrb[0].mxu0
    %836 = vdwg.mxu0
    %v838 = vrot.slane %v791, 4
    %v840 = vadd.f32 %v428, %v838
    %v841 = vxor.u32 %v840, 2147483648
    %v842 = vmul.f32 %v841, 1.442695
    %v843 = vpow.pop %v842
    %v844 = vadd.f32 %v843, 1.0
    %v845 = vrcp.pop %v844
    %v846 = vmul.f32 1.0, %v845
    %v848 = vrot.slane %v793, 4
    %v850 = vadd.f32 %v430, %v848
    %v851 = vxor.u32 %v850, 2147483648
    %v852 = vmul.f32 %v851, 1.442695
    %v853 = vpow.pop %v852
    %v854 = vadd.f32 %v853, 1.0
    %v855 = vrcp.pop %v854
    %v856 = vmul.f32 1.0, %v855
    %v858 = vrot.slane %v832, 4
    %v860 = vmul.f32 %v846, %v858
    %v861 = vadd.f32 %v471, %v860
    %v862 = vtanh.pop %v861
    %v863 = vsub.f32 1.0, %v856
    %v864 = vmul.f32 %v863, %v862
    %v866 = vrot.slane %v754, 4
    %v868 = vmul.f32 %v856, %v866
    %v869 = vadd.f32 %v864, %v868
    %v870 = vpack.c.bf16 %v869, %v869
    %v872 = vrot.slane %v870, 2
    %874 = vmatprep.subr.bf16.mxu0 %v606
    %875 = vmatpush1.bf16.msra.mxu0 %v605
    %876 = vmatprep.subr.bf16.mxu0 %v609
    %877 = vmatpush1.bf16.msra.mxu0 %v608
    %878 = vmatprep.subr.bf16.mxu0 %v612
    %879 = vmatpush1.bf16.msra.mxu0 %v611
    %880 = vmatprep.subr.bf16.mxu0 %v615
    %881 = vmatpush1.bf16.msra.mxu0 %v614
    %882 = vmatprep.subr.bf16.mxu0 %v618
    %883 = vmatpush1.bf16.msra.mxu0 %v617
    %884 = vmatprep.subr.bf16.mxu0 %v621
    %885 = vmatpush1.bf16.msra.mxu0 %v620
    %886 = vmatprep.subr.bf16.mxu0 %v624
    %887 = vmatpush1.bf16.msra.mxu0 %v623
    %888 = vmatprep.subr.bf16.mxu0 %v627
    %889 = vmatpush1.bf16.msra.mxu0 %v626
    %890 = vmatprep.subr.bf16.mxu0 0
    %891 = vmatpush1.bf16.msra.mxu0 0
    %892 = vmatprep.subr.bf16.mxu0 0
    %893 = vmatpush1.bf16.msra.mxu0 0
    %894 = vmatprep.subr.bf16.mxu0 0
    %895 = vmatpush1.bf16.msra.mxu0 0
    %896 = vmatprep.subr.bf16.mxu0 0
    %897 = vmatpush1.bf16.msra.mxu0 0
    %898 = vmatprep.subr.bf16.mxu0 0
    %899 = vmatpush1.bf16.msra.mxu0 0
    %900 = vmatprep.subr.bf16.mxu0 0
    %901 = vmatpush1.bf16.msra.mxu0 0
    %902 = vmatprep.subr.bf16.mxu0 0
    %903 = vmatpush1.bf16.msra.mxu0 0
    %904 = vmatprep.subr.bf16.mxu0 0
    %905 = vmatpush1.bf16.msra.mxu0 0
    %906 = vmatprep.mubr.bf16.mxu0 0
    %907 = vmatmul.mubr.bf16.gmra.mrb[0].mxu0 %v872
    %v908 = vpop.f32.mrb[0].mxu0
    %v909 = vadd.f32 %v481, %v908
    %v910 = vpop.f32.mrb[0].mxu0
    %v911 = vadd.f32 %v485, %v910
    %v912 = vpop.f32.mrb[0].mxu0
    %v913 = vpop.f32.mrb[0].mxu0
    %914 = vdwg.mxu0
    %915 = vmatprep.subr.bf16.mxu0 0
    %916 = vmatpush1.bf16.msra.mxu0 %v607
    %917 = vmatprep.subr.bf16.mxu0 0
    %918 = vmatpush1.bf16.msra.mxu0 %v610
    %919 = vmatprep.subr.bf16.mxu0 0
    %920 = vmatpush1.bf16.msra.mxu0 %v613
    %921 = vmatprep.subr.bf16.mxu0 0
    %922 = vmatpush1.bf16.msra.mxu0 %v616
    %923 = vmatprep.subr.bf16.mxu0 0
    %924 = vmatpush1.bf16.msra.mxu0 %v619
    %925 = vmatprep.subr.bf16.mxu0 0
    %926 = vmatpush1.bf16.msra.mxu0 %v622
    %927 = vmatprep.subr.bf16.mxu0 0
    %928 = vmatpush1.bf16.msra.mxu0 %v625
    %929 = vmatprep.subr.bf16.mxu0 0
    %930 = vmatpush1.bf16.msra.mxu0 %v628
    %931 = vmatprep.subr.bf16.mxu0 0
    %932 = vmatpush1.bf16.msra.mxu0 0
    %933 = vmatprep.subr.bf16.mxu0 0
    %934 = vmatpush1.bf16.msra.mxu0 0
    %935 = vmatprep.subr.bf16.mxu0 0
    %936 = vmatpush1.bf16.msra.mxu0 0
    %937 = vmatprep.subr.bf16.mxu0 0
    %938 = vmatpush1.bf16.msra.mxu0 0
    %939 = vmatprep.subr.bf16.mxu0 0
    %940 = vmatpush1.bf16.msra.mxu0 0
    %941 = vmatprep.subr.bf16.mxu0 0
    %942 = vmatpush1.bf16.msra.mxu0 0
    %943 = vmatprep.subr.bf16.mxu0 0
    %944 = vmatpush1.bf16.msra.mxu0 0
    %945 = vmatprep.subr.bf16.mxu0 0
    %946 = vmatpush1.bf16.msra.mxu0 0
    %947 = vmatprep.mubr.bf16.mxu0 0
    %948 = vmatmul.mubr.bf16.gmra.mrb[0].mxu0 %v872
    %v949 = vpop.f32.mrb[0].mxu0
    %v950 = vadd.f32 %v489, %v949
    %v951 = vpop.f32.mrb[0].mxu0
    %v952 = vpop.f32.mrb[0].mxu0
    %v953 = vpop.f32.mrb[0].mxu0
    %954 = vdwg.mxu0
    %v955 = vadd.f32 %v432, %v909
    %v956 = vxor.u32 %v955, 2147483648
    %v957 = vmul.f32 %v956, 1.442695
    %v958 = vpow.pop %v957
    %v959 = vadd.f32 %v958, 1.0
    %v960 = vrcp.pop %v959
    %v961 = vmul.f32 1.0, %v960
    %v962 = vadd.f32 %v434, %v911
    %v963 = vxor.u32 %v962, 2147483648
    %v964 = vmul.f32 %v963, 1.442695
    %v965 = vpow.pop %v964
    %v966 = vadd.f32 %v965, 1.0
    %v967 = vrcp.pop %v966
    %v968 = vmul.f32 1.0, %v967
    %v969 = vmul.f32 %v961, %v950
    %v970 = vadd.f32 %v474, %v969
    %v971 = vtanh.pop %v970
    %v972 = vsub.f32 1.0, %v968
    %v973 = vmul.f32 %v972, %v971
    %v975 = vrot.slane %v869, 4
    %v977 = vmul.f32 %v968, %v975
    %v978 = vadd.f32 %v973, %v977
    %v979 = vpack.c.bf16 %v978, %v978
    %980 = vmatprep.subr.bf16.mxu0 %v606
    %981 = vmatpush1.bf16.msra.mxu0 %v605
    %982 = vmatprep.subr.bf16.mxu0 %v609
    %983 = vmatpush1.bf16.msra.mxu0 %v608
    %984 = vmatprep.subr.bf16.mxu0 %v612
    %985 = vmatpush1.bf16.msra.mxu0 %v611
    %986 = vmatprep.subr.bf16.mxu0 %v615
    %987 = vmatpush1.bf16.msra.mxu0 %v614
    %988 = vmatprep.subr.bf16.mxu0 %v618
    %989 = vmatpush1.bf16.msra.mxu0 %v617
    %990 = vmatprep.subr.bf16.mxu0 %v621
    %991 = vmatpush1.bf16.msra.mxu0 %v620
    %992 = vmatprep.subr.bf16.mxu0 %v624
    %993 = vmatpush1.bf16.msra.mxu0 %v623
    %994 = vmatprep.subr.bf16.mxu0 %v627
    %995 = vmatpush1.bf16.msra.mxu0 %v626
    %996 = vmatprep.subr.bf16.mxu0 0
    %997 = vmatpush1.bf16.msra.mxu0 0
    %998 = vmatprep.subr.bf16.mxu0 0
    %999 = vmatpush1.bf16.msra.mxu0 0
    %1000 = vmatprep.subr.bf16.mxu0 0
    %1001 = vmatpush1.bf16.msra.mxu0 0
    %1002 = vmatprep.subr.bf16.mxu0 0
    %1003 = vmatpush1.bf16.msra.mxu0 0
    %1004 = vmatprep.subr.bf16.mxu0 0
    %1005 = vmatpush1.bf16.msra.mxu0 0
    %1006 = vmatprep.subr.bf16.mxu0 0
    %1007 = vmatpush1.bf16.msra.mxu0 0
    %1008 = vmatprep.subr.bf16.mxu0 0
    %1009 = vmatpush1.bf16.msra.mxu0 0
    %1010 = vmatprep.subr.bf16.mxu0 0
    %1011 = vmatpush1.bf16.msra.mxu0 0
    %1012 = vmatprep.mubr.bf16.mxu0 0
    %1013 = vmatmul.mubr.bf16.gmra.mrb[0].mxu0 %v979
    %v1014 = vpop.f32.mrb[0].mxu0
    %v1015 = vadd.f32 %v481, %v1014
    %v1016 = vpop.f32.mrb[0].mxu0
    %v1017 = vadd.f32 %v485, %v1016
    %v1018 = vpop.f32.mrb[0].mxu0
    %v1019 = vpop.f32.mrb[0].mxu0
    %1020 = vdwg.mxu0
    %1021 = vmatprep.subr.bf16.mxu0 0
    %1022 = vmatpush1.bf16.msra.mxu0 %v607
    %1023 = vmatprep.subr.bf16.mxu0 0
    %1024 = vmatpush1.bf16.msra.mxu0 %v610
    %1025 = vmatprep.subr.bf16.mxu0 0
    %1026 = vmatpush1.bf16.msra.mxu0 %v613
    %1027 = vmatprep.subr.bf16.mxu0 0
    %1028 = vmatpush1.bf16.msra.mxu0 %v616
    %1029 = vmatprep.subr.bf16.mxu0 0
    %1030 = vmatpush1.bf16.msra.mxu0 %v619
    %1031 = vmatprep.subr.bf16.mxu0 0
    %1032 = vmatpush1.bf16.msra.mxu0 %v622
    %1033 = vmatprep.subr.bf16.mxu0 0
    %1034 = vmatpush1.bf16.msra.mxu0 %v625
    %1035 = vmatprep.subr.bf16.mxu0 0
    %1036 = vmatpush1.bf16.msra.mxu0 %v628
    %1037 = vmatprep.subr.bf16.mxu0 0
    %1038 = vmatpush1.bf16.msra.mxu0 0
    %1039 = vmatprep.subr.bf16.mxu0 0
    %1040 = vmatpush1.bf16.msra.mxu0 0
    %1041 = vmatprep.subr.bf16.mxu0 0
    %1042 = vmatpush1.bf16.msra.mxu0 0
    %1043 = vmatprep.subr.bf16.mxu0 0
    %1044 = vmatpush1.bf16.msra.mxu0 0
    %1045 = vmatprep.subr.bf16.mxu0 0
    %1046 = vmatpush1.bf16.msra.mxu0 0
    %1047 = vmatprep.subr.bf16.mxu0 0
    %1048 = vmatpush1.bf16.msra.mxu0 0
    %1049 = vmatprep.subr.bf16.mxu0 0
    %1050 = vmatpush1.bf16.msra.mxu0 0
    %1051 = vmatprep.subr.bf16.mxu0 0
    %1052 = vmatpush1.bf16.msra.mxu0 0
    %1053 = vmatprep.mubr.bf16.mxu0 0
    %1054 = vmatmul.mubr.bf16.gmra.mrb[0].mxu0 %v979
    %v1055 = vpop.f32.mrb[0].mxu0
    %v1056 = vadd.f32 %v489, %v1055
    %v1057 = vpop.f32.mrb[0].mxu0
    %v1058 = vpop.f32.mrb[0].mxu0
    %v1059 = vpop.f32.mrb[0].mxu0
    %1060 = vdwg.mxu0
    %v1062 = vrot.slane %v1015, 4
    %v1064 = vadd.f32 %v432, %v1062
    %v1065 = vxor.u32 %v1064, 2147483648
    %v1066 = vmul.f32 %v1065, 1.442695
    %v1067 = vpow.pop %v1066
    %v1068 = vadd.f32 %v1067, 1.0
    %v1069 = vrcp.pop %v1068
    %v1070 = vmul.f32 1.0, %v1069
    %v1072 = vrot.slane %v1017, 4
    %v1074 = vadd.f32 %v434, %v1072
    %v1075 = vxor.u32 %v1074, 2147483648
    %v1076 = vmul.f32 %v1075, 1.442695
    %v1077 = vpow.pop %v1076
    %v1078 = vadd.f32 %v1077, 1.0
    %v1079 = vrcp.pop %v1078
    %v1080 = vmul.f32 1.0, %v1079
    %v1082 = vrot.slane %v1056, 4
    %v1084 = vmul.f32 %v1070, %v1082
    %v1085 = vadd.f32 %v474, %v1084
    %v1086 = vtanh.pop %v1085
    %v1087 = vsub.f32 1.0, %v1080
    %v1088 = vmul.f32 %v1087, %v1086
    %v1090 = vrot.slane %v978, 4
    %v1092 = vmul.f32 %v1080, %v1090
    %v1093 = vadd.f32 %v1088, %v1092
    %v1094 = vpack.c.bf16 %v1093, %v1093
    %v1096 = vrot.slane %v1094, 2
    %1098 = vmatprep.subr.bf16.mxu0 %v606
    %1099 = vmatpush1.bf16.msra.mxu0 %v605
    %1100 = vmatprep.subr.bf16.mxu0 %v609
    %1101 = vmatpush1.bf16.msra.mxu0 %v608
    %1102 = vmatprep.subr.bf16.mxu0 %v612
    %1103 = vmatpush1.bf16.msra.mxu0 %v611
    %1104 = vmatprep.subr.bf16.mxu0 %v615
    %1105 = vmatpush1.bf16.msra.mxu0 %v614
    %1106 = vmatprep.subr.bf16.mxu0 %v618
    %1107 = vmatpush1.bf16.msra.mxu0 %v617
    %1108 = vmatprep.subr.bf16.mxu0 %v621
    %1109 = vmatpush1.bf16.msra.mxu0 %v620
    %1110 = vmatprep.subr.bf16.mxu0 %v624
    %1111 = vmatpush1.bf16.msra.mxu0 %v623
    %1112 = vmatprep.subr.bf16.mxu0 %v627
    %1113 = vmatpush1.bf16.msra.mxu0 %v626
    %1114 = vmatprep.subr.bf16.mxu0 0
    %1115 = vmatpush1.bf16.msra.mxu0 0
    %1116 = vmatprep.subr.bf16.mxu0 0
    %1117 = vmatpush1.bf16.msra.mxu0 0
    %1118 = vmatprep.subr.bf16.mxu0 0
    %1119 = vmatpush1.bf16.msra.mxu0 0
    %1120 = vmatprep.subr.bf16.mxu0 0
    %1121 = vmatpush1.bf16.msra.mxu0 0
    %1122 = vmatprep.subr.bf16.mxu0 0
    %1123 = vmatpush1.bf16.msra.mxu0 0
    %1124 = vmatprep.subr.bf16.mxu0 0
    %1125 = vmatpush1.bf16.msra.mxu0 0
    %1126 = vmatprep.subr.bf16.mxu0 0
    %1127 = vmatpush1.bf16.msra.mxu0 0
    %1128 = vmatprep.subr.bf16.mxu0 0
    %1129 = vmatpush1.bf16.msra.mxu0 0
    %1130 = vmatprep.mubr.bf16.mxu0 0
    %1131 = vmatmul.mubr.bf16.gmra.mrb[0].mxu0 %v1096
    %v1132 = vpop.f32.mrb[0].mxu0
    %v1133 = vadd.f32 %v481, %v1132
    %v1134 = vpop.f32.mrb[0].mxu0
    %v1135 = vadd.f32 %v485, %v1134
    %v1136 = vpop.f32.mrb[0].mxu0
    %v1137 = vpop.f32.mrb[0].mxu0
    %1138 = vdwg.mxu0
    %1139 = vmatprep.subr.bf16.mxu0 0
    %1140 = vmatpush1.bf16.msra.mxu0 %v607
    %1141 = vmatprep.subr.bf16.mxu0 0
    %1142 = vmatpush1.bf16.msra.mxu0 %v610
    %1143 = vmatprep.subr.bf16.mxu0 0
    %1144 = vmatpush1.bf16.msra.mxu0 %v613
    %1145 = vmatprep.subr.bf16.mxu0 0
    %1146 = vmatpush1.bf16.msra.mxu0 %v616
    %1147 = vmatprep.subr.bf16.mxu0 0
    %1148 = vmatpush1.bf16.msra.mxu0 %v619
    %1149 = vmatprep.subr.bf16.mxu0 0
    %1150 = vmatpush1.bf16.msra.mxu0 %v622
    %1151 = vmatprep.subr.bf16.mxu0 0
    %1152 = vmatpush1.bf16.msra.mxu0 %v625
    %1153 = vmatprep.subr.bf16.mxu0 0
    %1154 = vmatpush1.bf16.msra.mxu0 %v628
    %1155 = vmatprep.subr.bf16.mxu0 0
    %1156 = vmatpush1.bf16.msra.mxu0 0
    %1157 = vmatprep.subr.bf16.mxu0 0
    %1158 = vmatpush1.bf16.msra.mxu0 0
    %1159 = vmatprep.subr.bf16.mxu0 0
    %1160 = vmatpush1.bf16.msra.mxu0 0
    %1161 = vmatprep.subr.bf16.mxu0 0
    %1162 = vmatpush1.bf16.msra.mxu0 0
    %1163 = vmatprep.subr.bf16.mxu0 0
    %1164 = vmatpush1.bf16.msra.mxu0 0
    %1165 = vmatprep.subr.bf16.mxu0 0
    %1166 = vmatpush1.bf16.msra.mxu0 0
    %1167 = vmatprep.subr.bf16.mxu0 0
    %1168 = vmatpush1.bf16.msra.mxu0 0
    %1169 = vmatprep.subr.bf16.mxu0 0
    %1170 = vmatpush1.bf16.msra.mxu0 0
    %1171 = vmatprep.mubr.bf16.mxu0 0
    %1172 = vmatmul.mubr.bf16.gmra.mrb[0].mxu0 %v1096
    %v1173 = vpop.f32.mrb[0].mxu0
    %v1174 = vadd.f32 %v489, %v1173
    %v1175 = vpop.f32.mrb[0].mxu0
    %v1176 = vpop.f32.mrb[0].mxu0
    %v1177 = vpop.f32.mrb[0].mxu0
    %1178 = vdwg.mxu0
    %v1182 = vrot.slane %v1133, 4
    %v1183 = vrot.slane %v1135, 4
    %v1184 = vrot.slane %v1174, 4
    %v1188 = vsel %vm161, %v1133, %v1182
    %v1189 = vsel %vm161, %v1135, %v1183
    %v1190 = vsel %vm161, %v1174, %v1184
    %v1192 = vrot.slane %v1093, 4
    %v1194 = vsel %vm161, %v1192, %v1093
    %v1195 = vadd.f32 %v46, %v1188
    %v1196 = vxor.u32 %v1195, 2147483648
    %v1197 = vmul.f32 %v1196, 1.442695
    %v1198 = vpow.pop %v1197
    %v1199 = vadd.f32 %v1198, 1.0
    %v1200 = vrcp.pop %v1199
    %v1201 = vmul.f32 1.0, %v1200
    %v1202 = vadd.f32 %v47, %v1189
    %v1203 = vxor.u32 %v1202, 2147483648
    %v1204 = vmul.f32 %v1203, 1.442695
    %v1205 = vpow.pop %v1204
    %v1206 = vadd.f32 %v1205, 1.0
    %v1207 = vrcp.pop %v1206
    %v1208 = vmul.f32 1.0, %v1207
    %v1209 = vmul.f32 %v1201, %v1190
    %v1210 = vadd.f32 %v48, %v1209
    %v1211 = vtanh.pop %v1210
    %v1212 = vsub.f32 1.0, %v1208
    %v1213 = vmul.f32 %v1212, %v1211
    %v1214 = vmul.f32 %v1208, %v1194
    %v1215 = vadd.f32 %v1213, %v1214
    %v1216 = vld [vmem:[%s2] sm:$0xc]
    %v1217 = vpack.c.bf16 %v1215, %v1215
    %v1219 = vunpack.c.l.b16 %v1216
    %v1220 = vpack.c.b16 %v1219, %v1219
    %v1221 = vrot.slane %v1220, 2
    %v1224 = vrot.slane %v54, 3
    %1226 = vmatprep.subr.bf16.mxu0 0
    %1227 = vmatpush1.bf16.xpose.msra.mxu0 %v1217
    %1228 = vmatprep.subr.bf16.mxu0 0
    %1229 = vmatpush1.bf16.xpose.msra.mxu0 0
    %1230 = vmatprep.subr.bf16.mxu0 0
    %1231 = vmatpush1.bf16.xpose.msra.mxu0 0
    %1232 = vmatprep.subr.bf16.mxu0 0
    %1233 = vmatpush1.bf16.xpose.msra.mxu0 0
    %1234 = vmatprep.subr.bf16.mxu0 0
    %1235 = vmatpush1.bf16.xpose.msra.mxu0 0
    %1236 = vmatprep.subr.bf16.mxu0 0
    %1237 = vmatpush1.bf16.xpose.msra.mxu0 0
    %1238 = vmatprep.subr.bf16.mxu0 0
    %1239 = vmatpush1.bf16.xpose.msra.mxu0 0
    %1240 = vmatprep.subr.bf16.mxu0 0
    %1241 = vmatpush1.bf16.xpose.msra.mxu0 0
    %1242 = vmatprep.subr.bf16.mxu0 0
    %1243 = vmatpush1.bf16.xpose.msra.mxu0 0
    %1244 = vmatprep.subr.bf16.mxu0 0
    %1245 = vmatpush1.bf16.xpose.msra.mxu0 0
    %1246 = vmatprep.subr.bf16.mxu0 0
    %1247 = vmatpush1.bf16.xpose.msra.mxu0 0
    %1248 = vmatprep.subr.bf16.mxu0 0
    %1249 = vmatpush1.bf16.xpose.msra.mxu0 0
    %1250 = vmatprep.subr.bf16.mxu0 0
    %1251 = vmatpush1.bf16.xpose.msra.mxu0 0
    %1252 = vmatprep.subr.bf16.mxu0 0
    %1253 = vmatpush1.bf16.xpose.msra.mxu0 0
    %1254 = vmatprep.subr.bf16.mxu0 0
    %1255 = vmatpush1.bf16.xpose.msra.mxu0 0
    %1256 = vmatprep.subr.bf16.mxu0 0
    %1257 = vmatpush1.bf16.xpose.msra.mxu0 0
    %1258 = vmatprep.mubr.bf16.mxu0 0
    %1259 = vmatmul.mubr.bf16.gmra.mrb[0].mxu0 %v1221
    %v1260 = vpop.f32.mrb[0].mxu0
    %v1261 = vadd.f32 %v1224, %v1260
    %v1262 = vpop.f32.mrb[0].mxu0
    %v1263 = vpop.f32.mrb[0].mxu0
    %v1264 = vpop.f32.mrb[0].mxu0
    %1265 = vdwg.mxu0
    %v1267 = vrot.slane %v1261, 4
    %1268 = vrot.lane.b32.xlu0 %v1267, 124
    %v1269 = vpop.permute.xlu0 %1268
    %v1271 = vsel %vm161, %v1261, %v1269
    %v1272 = vadd.f32 %v1271, %v60
    %1273 = vst.msk [vmem:[%s4] sm:$0xff] %vm70, %v1272
    // Predicated region
    $region26: #{segrnn_forward.1} parent=1 // pred_check
      _
    $region27: #{segrnn_forward.1} parent=1 // pred_check_branch
      %1275 = sbr.rel (0) target = $region29
    $region28: #{segrnn_forward.1} parent=1 // pred_region
      _
    $region29: #{segrnn_forward.1} parent=1 // pred_fallthru
      _
    // Predicated region
    $region30: #{segrnn_forward.1} parent=1 // pred_check
      _
    $region31: #{segrnn_forward.1} parent=1 // pred_check_branch
      %1277 = sbr.rel (0) target = $region33
    $region32: #{segrnn_forward.1} parent=1 // pred_region
      _
    $region33: #{segrnn_forward.1} parent=1 // pred_fallthru
      _
    %1278 = vsyncpa [#allocation3], 1
    %1279 = vsyncpa [#allocation5], 1

</llo_original>
